<compile_context>
chip_gen: v5e
topology: v5e:2x2
jax: 0.10.0
libtpu: 0.0.40
codegen_flags: <defaults>
</compile_context>

<pallas_src>
import jax
import jax.numpy as jnp
from jax.experimental import pallas as pl
from jax.experimental.pallas import tpu as pltpu

SUB = 8      # sublanes per batch chunk (one f32 vreg row-block)
LANES = 128  # lane width
LAYER_DIMS = ((7, 7), (7, 7), (7, 7), (2, 7))  # (out, in) per Linear


def _round_up(n, m):
    return ((n + m - 1) // m) * m


def _mlp_kernel(x_ref, wb_ref, o_ref):
    # x_ref : (7, TS, 8, 128)  feature planes; batch laid out as
    #                          (chunk, sublane, lane)
    # wb_ref: (256, 8, 128)    broadcast weight/bias planes, VMEM resident;
    #                          plane (layer*8 + out)*8 + in, in==7 is bias
    # o_ref : (2, TS, 8, 128)  softmax probabilities per class
    n_chunks = x_ref.shape[1]

    def body(j, carry):
        # One (8,128) batch chunk per feature -> tiny live vreg set; all the
        # contraction work is plain VPU vmul/vadd against broadcast planes.
        h = [x_ref[k, j] for k in range(7)]

        for layer, (out_f, in_f) in enumerate(LAYER_DIMS):
            new_h = []
            for o in range(out_f):
                base = (layer * 8 + o) * 8
                acc = wb_ref[base + 7]                 # bias plane
                for k in range(in_f):
                    acc = acc + h[k] * wb_ref[base + k]
                new_h.append(jnp.maximum(acc, 0.0))    # ReLU
            h = new_h

        # Softmax over the 2-class axis == stable sigmoid of the logit diff.
        d = h[1] - h[0]
        e = jnp.exp(-jnp.abs(d))
        r = pl.reciprocal(1.0 + e, approx=False)  # single shared reciprocal
        p1 = jnp.where(d >= 0, r, e * r)
        o_ref[0, j] = 1.0 - p1                    # direct sub-stores, no concat
        o_ref[1, j] = p1
        return carry

    jax.lax.fori_loop(0, n_chunks, body, 0)


def _pack_params(params):
    """Pack four (W, b) pairs (PyTorch (out,in)) into (4,8,8): W in
    [:out,:in], bias in column 7, zeros elsewhere."""
    blocks = []
    for w, b in params:
        out_f, in_f = w.shape
        a = jnp.zeros((8, 8), jnp.float32)
        a = a.at[:out_f, :in_f].set(w.astype(jnp.float32))
        a = a.at[:out_f, 7].set(b.astype(jnp.float32))
        blocks.append(a)
    return jnp.stack(blocks)  # (4, 8, 8)


def _rnn_forward(x, params, *, max_tile_b=32768):
    """x: [batch, 7] float32 -> [batch, 2] float32 (softmax probabilities)."""
    batch = x.shape[0]

    # ---- batch tiling ----------------------------------------------------
    max_rows = max(SUB, (max_tile_b // LANES) // SUB * SUB)
    rows = pl.cdiv(batch, LANES)                     # 128-lane rows needed
    # Keep >=2 grid steps when the batch allows so ("parallel",) can shard
    # across both v7x TensorCores (no effect on single-TC v5e/v6e).
    half_rows = _round_up(pl.cdiv(rows, 2), SUB)
    tile_rows = max(SUB, min(max_rows, half_rows))
    rows_pad = _round_up(max(rows, 1), tile_rows)
    b_pad = rows_pad * LANES
    n_chunks_total = rows_pad // SUB
    tile_chunks = tile_rows // SUB
    grid = (rows_pad // tile_rows,)

    # ---- host-side prep (fuses under jit into one pad+transpose pass) ----
    xp = jnp.pad(x.astype(jnp.float32), ((0, b_pad - batch), (0, 0)))
    x4 = xp.T.reshape(7, n_chunks_total, SUB, LANES)

    w_slab = _pack_params(params)                                    # (4,8,8)
    wb = jnp.broadcast_to(w_slab.reshape(256, 1, 1),
                          (256, SUB, LANES))                         # ~1 MiB

    out4 = pl.pallas_call(
        _mlp_kernel,
        out_shape=jax.ShapeDtypeStruct((2, n_chunks_total, SUB, LANES),
                                       jnp.float32),
        grid=grid,
        in_specs=[
            pl.BlockSpec((7, tile_chunks, SUB, LANES),
                         lambda i: (0, i, 0, 0)),        # x: blocked over batch
            pl.BlockSpec((256, SUB, LANES),
                         lambda i: (0, 0, 0)),           # weights: resident
        ],
        out_specs=pl.BlockSpec((2, tile_chunks, SUB, LANES),
                               lambda i: (0, i, 0, 0)),
        compiler_params=pltpu.CompilerParams(
            dimension_semantics=("parallel",)),
    )(x4, wb)

    # Drop batch padding, return PyTorch (batch, 2) layout.
    return out4.reshape(2, b_pad)[:, :batch].T


rnn_forward = jax.jit(_rnn_forward, static_argnames=("max_tile_b",))


def init_params(key):
    """Deterministic init mirroring nn.Linear default U(-1/sqrt(in), 1/sqrt(in))."""
    dims = [(7, 7), (7, 7), (7, 7), (2, 7)]  # (out, in), PyTorch convention
    params = []
    for (out_f, in_f) in dims:
        key, kw, kb = jax.random.split(key, 3)
        bound = 1.0 / (in_f ** 0.5)
        w = jax.random.uniform(kw, (out_f, in_f), jnp.float32, -bound, bound)
        b = jax.random.uniform(kb, (out_f,), jnp.float32, -bound, bound)
        params.append((w, b))
    return params


def reference_forward(x, params):
    """Plain-JAX reference of the same forward pass (for sanity check)."""
    h = x
    for w, b in params:
        h = jnp.maximum(h @ w.T + b, 0.0)
    m = jnp.max(h, axis=1, keepdims=True)
    e = jnp.exp(h - m)
    return e / jnp.sum(e, axis=1, keepdims=True)


if __name__ == "__main__":
    key = jax.random.PRNGKey(0)
    kx, kp = jax.random.split(key)
    params = init_params(kp)

    # Small primary test (batch=8).
    batch = 8
    x = jax.random.normal(kx, (batch, 7), jnp.float32)
    out = jax.block_until_ready(rnn_forward(x, params))
    ref = reference_forward(x, params)
    assert out.shape == (batch, 2), out.shape
    assert jnp.allclose(out, ref, atol=1e-5, rtol=1e-5), (out, ref)
    assert jnp.allclose(jnp.sum(out, axis=1), 1.0, atol=1e-5)

    # Multi-step batch grid (>=2 steps -> both v7x cores) + padded tail tile.
    batch2 = 3000
    x2 = jax.random.normal(jax.random.PRNGKey(1), (batch2, 7), jnp.float32)
    out2 = jax.block_until_ready(rnn_forward(x2, params, max_tile_b=1024))
    ref2 = reference_forward(x2, params)
    assert out2.shape == (batch2, 2), out2.shape
    assert jnp.allclose(out2, ref2, atol=1e-5, rtol=1e-5)

    print("KERNEL_OK")
</pallas_src>

<mosaic_0001>
module attributes {stable_mosaic.version = 11 : i64} {
  func.func @_mlp_kernel(%arg0: i32, %arg1: memref<7x1x8x128xf32, #tpu.memory_space<vmem>>, %arg2: memref<256x8x128xf32, #tpu.memory_space<vmem>>, %arg3: memref<2x1x8x128xf32, #tpu.memory_space<vmem>>) attributes {dimension_semantics = [#tpu.dimension_semantics<parallel>], iteration_bounds = array<i64: 1>, scalar_prefetch = 0 : i64, scratch_operands = 0 : i64, tpu.core_type = #tpu.core_type<tc>, window_params = [{transform_indices = @transform_0, window_bounds = array<i64: 7, 1, 8, 128>}, {pipeline_mode = #tpu.pipeline_mode<synchronous>, transform_indices = @transform_1, window_bounds = array<i64: 256, 8, 128>}, {transform_indices = @transform_2, window_bounds = array<i64: 2, 1, 8, 128>}]} {
    %c0_i32 = arith.constant 0 : i32
    %c0 = arith.constant 0 : index
    %0 = arith.index_cast %c0_i32 : i32 to index
    %c0_0 = arith.constant 0 : index
    %c0_1 = arith.constant 0 : index
    %1 = vector.load %arg1[%c0, %0, %c0_0, %c0_1] : memref<7x1x8x128xf32, #tpu.memory_space<vmem>>, vector<1x1x8x128xf32>
    %2 = vector.shape_cast %1 : vector<1x1x8x128xf32> to vector<8x128xf32>
    %c1 = arith.constant 1 : index
    %3 = arith.index_cast %c0_i32 : i32 to index
    %c0_2 = arith.constant 0 : index
    %c0_3 = arith.constant 0 : index
    %4 = vector.load %arg1[%c1, %3, %c0_2, %c0_3] : memref<7x1x8x128xf32, #tpu.memory_space<vmem>>, vector<1x1x8x128xf32>
    %5 = vector.shape_cast %4 : vector<1x1x8x128xf32> to vector<8x128xf32>
    %c2 = arith.constant 2 : index
    %6 = arith.index_cast %c0_i32 : i32 to index
    %c0_4 = arith.constant 0 : index
    %c0_5 = arith.constant 0 : index
    %7 = vector.load %arg1[%c2, %6, %c0_4, %c0_5] : memref<7x1x8x128xf32, #tpu.memory_space<vmem>>, vector<1x1x8x128xf32>
    %8 = vector.shape_cast %7 : vector<1x1x8x128xf32> to vector<8x128xf32>
    %c3 = arith.constant 3 : index
    %9 = arith.index_cast %c0_i32 : i32 to index
    %c0_6 = arith.constant 0 : index
    %c0_7 = arith.constant 0 : index
    %10 = vector.load %arg1[%c3, %9, %c0_6, %c0_7] : memref<7x1x8x128xf32, #tpu.memory_space<vmem>>, vector<1x1x8x128xf32>
    %11 = vector.shape_cast %10 : vector<1x1x8x128xf32> to vector<8x128xf32>
    %c4 = arith.constant 4 : index
    %12 = arith.index_cast %c0_i32 : i32 to index
    %c0_8 = arith.constant 0 : index
    %c0_9 = arith.constant 0 : index
    %13 = vector.load %arg1[%c4, %12, %c0_8, %c0_9] : memref<7x1x8x128xf32, #tpu.memory_space<vmem>>, vector<1x1x8x128xf32>
    %14 = vector.shape_cast %13 : vector<1x1x8x128xf32> to vector<8x128xf32>
    %c5 = arith.constant 5 : index
    %15 = arith.index_cast %c0_i32 : i32 to index
    %c0_10 = arith.constant 0 : index
    %c0_11 = arith.constant 0 : index
    %16 = vector.load %arg1[%c5, %15, %c0_10, %c0_11] : memref<7x1x8x128xf32, #tpu.memory_space<vmem>>, vector<1x1x8x128xf32>
    %17 = vector.shape_cast %16 : vector<1x1x8x128xf32> to vector<8x128xf32>
    %c6 = arith.constant 6 : index
    %18 = arith.index_cast %c0_i32 : i32 to index
    %c0_12 = arith.constant 0 : index
    %c0_13 = arith.constant 0 : index
    %19 = vector.load %arg1[%c6, %18, %c0_12, %c0_13] : memref<7x1x8x128xf32, #tpu.memory_space<vmem>>, vector<1x1x8x128xf32>
    %20 = vector.shape_cast %19 : vector<1x1x8x128xf32> to vector<8x128xf32>
    %c7 = arith.constant 7 : index
    %c0_14 = arith.constant 0 : index
    %c0_15 = arith.constant 0 : index
    %21 = vector.load %arg2[%c7, %c0_14, %c0_15] : memref<256x8x128xf32, #tpu.memory_space<vmem>>, vector<1x8x128xf32>
    %22 = vector.shape_cast %21 : vector<1x8x128xf32> to vector<8x128xf32>
    %c0_16 = arith.constant 0 : index
    %c0_17 = arith.constant 0 : index
    %c0_18 = arith.constant 0 : index
    %23 = vector.load %arg2[%c0_16, %c0_17, %c0_18] : memref<256x8x128xf32, #tpu.memory_space<vmem>>, vector<1x8x128xf32>
    %24 = vector.shape_cast %23 : vector<1x8x128xf32> to vector<8x128xf32>
    %25 = arith.mulf %2, %24 : vector<8x128xf32>
    %26 = arith.addf %22, %25 : vector<8x128xf32>
    %c1_19 = arith.constant 1 : index
    %c0_20 = arith.constant 0 : index
    %c0_21 = arith.constant 0 : index
    %27 = vector.load %arg2[%c1_19, %c0_20, %c0_21] : memref<256x8x128xf32, #tpu.memory_space<vmem>>, vector<1x8x128xf32>
    %28 = vector.shape_cast %27 : vector<1x8x128xf32> to vector<8x128xf32>
    %29 = arith.mulf %5, %28 : vector<8x128xf32>
    %30 = arith.addf %26, %29 : vector<8x128xf32>
    %c2_22 = arith.constant 2 : index
    %c0_23 = arith.constant 0 : index
    %c0_24 = arith.constant 0 : index
    %31 = vector.load %arg2[%c2_22, %c0_23, %c0_24] : memref<256x8x128xf32, #tpu.memory_space<vmem>>, vector<1x8x128xf32>
    %32 = vector.shape_cast %31 : vector<1x8x128xf32> to vector<8x128xf32>
    %33 = arith.mulf %8, %32 : vector<8x128xf32>
    %34 = arith.addf %30, %33 : vector<8x128xf32>
    %c3_25 = arith.constant 3 : index
    %c0_26 = arith.constant 0 : index
    %c0_27 = arith.constant 0 : index
    %35 = vector.load %arg2[%c3_25, %c0_26, %c0_27] : memref<256x8x128xf32, #tpu.memory_space<vmem>>, vector<1x8x128xf32>
    %36 = vector.shape_cast %35 : vector<1x8x128xf32> to vector<8x128xf32>
    %37 = arith.mulf %11, %36 : vector<8x128xf32>
    %38 = arith.addf %34, %37 : vector<8x128xf32>
    %c4_28 = arith.constant 4 : index
    %c0_29 = arith.constant 0 : index
    %c0_30 = arith.constant 0 : index
    %39 = vector.load %arg2[%c4_28, %c0_29, %c0_30] : memref<256x8x128xf32, #tpu.memory_space<vmem>>, vector<1x8x128xf32>
    %40 = vector.shape_cast %39 : vector<1x8x128xf32> to vector<8x128xf32>
    %41 = arith.mulf %14, %40 : vector<8x128xf32>
    %42 = arith.addf %38, %41 : vector<8x128xf32>
    %c5_31 = arith.constant 5 : index
    %c0_32 = arith.constant 0 : index
    %c0_33 = arith.constant 0 : index
    %43 = vector.load %arg2[%c5_31, %c0_32, %c0_33] : memref<256x8x128xf32, #tpu.memory_space<vmem>>, vector<1x8x128xf32>
    %44 = vector.shape_cast %43 : vector<1x8x128xf32> to vector<8x128xf32>
    %45 = arith.mulf %17, %44 : vector<8x128xf32>
    %46 = arith.addf %42, %45 : vector<8x128xf32>
    %c6_34 = arith.constant 6 : index
    %c0_35 = arith.constant 0 : index
    %c0_36 = arith.constant 0 : index
    %47 = vector.load %arg2[%c6_34, %c0_35, %c0_36] : memref<256x8x128xf32, #tpu.memory_space<vmem>>, vector<1x8x128xf32>
    %48 = vector.shape_cast %47 : vector<1x8x128xf32> to vector<8x128xf32>
    %49 = arith.mulf %20, %48 : vector<8x128xf32>
    %50 = arith.addf %46, %49 : vector<8x128xf32>
    %cst = arith.constant 0.000000e+00 : f32
    %51 = vector.broadcast %cst : f32 to vector<8x128xf32>
    %52 = arith.maximumf %50, %51 : vector<8x128xf32>
    %c15 = arith.constant 15 : index
    %c0_37 = arith.constant 0 : index
    %c0_38 = arith.constant 0 : index
    %53 = vector.load %arg2[%c15, %c0_37, %c0_38] : memref<256x8x128xf32, #tpu.memory_space<vmem>>, vector<1x8x128xf32>
    %54 = vector.shape_cast %53 : vector<1x8x128xf32> to vector<8x128xf32>
    %c8 = arith.constant 8 : index
    %c0_39 = arith.constant 0 : index
    %c0_40 = arith.constant 0 : index
    %55 = vector.load %arg2[%c8, %c0_39, %c0_40] : memref<256x8x128xf32, #tpu.memory_space<vmem>>, vector<1x8x128xf32>
    %56 = vector.shape_cast %55 : vector<1x8x128xf32> to vector<8x128xf32>
    %57 = arith.mulf %2, %56 : vector<8x128xf32>
    %58 = arith.addf %54, %57 : vector<8x128xf32>
    %c9 = arith.constant 9 : index
    %c0_41 = arith.constant 0 : index
    %c0_42 = arith.constant 0 : index
    %59 = vector.load %arg2[%c9, %c0_41, %c0_42] : memref<256x8x128xf32, #tpu.memory_space<vmem>>, vector<1x8x128xf32>
    %60 = vector.shape_cast %59 : vector<1x8x128xf32> to vector<8x128xf32>
    %61 = arith.mulf %5, %60 : vector<8x128xf32>
    %62 = arith.addf %58, %61 : vector<8x128xf32>
    %c10 = arith.constant 10 : index
    %c0_43 = arith.constant 0 : index
    %c0_44 = arith.constant 0 : index
    %63 = vector.load %arg2[%c10, %c0_43, %c0_44] : memref<256x8x128xf32, #tpu.memory_space<vmem>>, vector<1x8x128xf32>
    %64 = vector.shape_cast %63 : vector<1x8x128xf32> to vector<8x128xf32>
    %65 = arith.mulf %8, %64 : vector<8x128xf32>
    %66 = arith.addf %62, %65 : vector<8x128xf32>
    %c11 = arith.constant 11 : index
    %c0_45 = arith.constant 0 : index
    %c0_46 = arith.constant 0 : index
    %67 = vector.load %arg2[%c11, %c0_45, %c0_46] : memref<256x8x128xf32, #tpu.memory_space<vmem>>, vector<1x8x128xf32>
    %68 = vector.shape_cast %67 : vector<1x8x128xf32> to vector<8x128xf32>
    %69 = arith.mulf %11, %68 : vector<8x128xf32>
    %70 = arith.addf %66, %69 : vector<8x128xf32>
    %c12 = arith.constant 12 : index
    %c0_47 = arith.constant 0 : index
    %c0_48 = arith.constant 0 : index
    %71 = vector.load %arg2[%c12, %c0_47, %c0_48] : memref<256x8x128xf32, #tpu.memory_space<vmem>>, vector<1x8x128xf32>
    %72 = vector.shape_cast %71 : vector<1x8x128xf32> to vector<8x128xf32>
    %73 = arith.mulf %14, %72 : vector<8x128xf32>
    %74 = arith.addf %70, %73 : vector<8x128xf32>
    %c13 = arith.constant 13 : index
    %c0_49 = arith.constant 0 : index
    %c0_50 = arith.constant 0 : index
    %75 = vector.load %arg2[%c13, %c0_49, %c0_50] : memref<256x8x128xf32, #tpu.memory_space<vmem>>, vector<1x8x128xf32>
    %76 = vector.shape_cast %75 : vector<1x8x128xf32> to vector<8x128xf32>
    %77 = arith.mulf %17, %76 : vector<8x128xf32>
    %78 = arith.addf %74, %77 : vector<8x128xf32>
    %c14 = arith.constant 14 : index
    %c0_51 = arith.constant 0 : index
    %c0_52 = arith.constant 0 : index
    %79 = vector.load %arg2[%c14, %c0_51, %c0_52] : memref<256x8x128xf32, #tpu.memory_space<vmem>>, vector<1x8x128xf32>
    %80 = vector.shape_cast %79 : vector<1x8x128xf32> to vector<8x128xf32>
    %81 = arith.mulf %20, %80 : vector<8x128xf32>
    %82 = arith.addf %78, %81 : vector<8x128xf32>
    %cst_53 = arith.constant 0.000000e+00 : f32
    %83 = vector.broadcast %cst_53 : f32 to vector<8x128xf32>
    %84 = arith.maximumf %82, %83 : vector<8x128xf32>
    %c23 = arith.constant 23 : index
    %c0_54 = arith.constant 0 : index
    %c0_55 = arith.constant 0 : index
    %85 = vector.load %arg2[%c23, %c0_54, %c0_55] : memref<256x8x128xf32, #tpu.memory_space<vmem>>, vector<1x8x128xf32>
    %86 = vector.shape_cast %85 : vector<1x8x128xf32> to vector<8x128xf32>
    %c16 = arith.constant 16 : index
    %c0_56 = arith.constant 0 : index
    %c0_57 = arith.constant 0 : index
    %87 = vector.load %arg2[%c16, %c0_56, %c0_57] : memref<256x8x128xf32, #tpu.memory_space<vmem>>, vector<1x8x128xf32>
    %88 = vector.shape_cast %87 : vector<1x8x128xf32> to vector<8x128xf32>
    %89 = arith.mulf %2, %88 : vector<8x128xf32>
    %90 = arith.addf %86, %89 : vector<8x128xf32>
    %c17 = arith.constant 17 : index
    %c0_58 = arith.constant 0 : index
    %c0_59 = arith.constant 0 : index
    %91 = vector.load %arg2[%c17, %c0_58, %c0_59] : memref<256x8x128xf32, #tpu.memory_space<vmem>>, vector<1x8x128xf32>
    %92 = vector.shape_cast %91 : vector<1x8x128xf32> to vector<8x128xf32>
    %93 = arith.mulf %5, %92 : vector<8x128xf32>
    %94 = arith.addf %90, %93 : vector<8x128xf32>
    %c18 = arith.constant 18 : index
    %c0_60 = arith.constant 0 : index
    %c0_61 = arith.constant 0 : index
    %95 = vector.load %arg2[%c18, %c0_60, %c0_61] : memref<256x8x128xf32, #tpu.memory_space<vmem>>, vector<1x8x128xf32>
    %96 = vector.shape_cast %95 : vector<1x8x128xf32> to vector<8x128xf32>
    %97 = arith.mulf %8, %96 : vector<8x128xf32>
    %98 = arith.addf %94, %97 : vector<8x128xf32>
    %c19 = arith.constant 19 : index
    %c0_62 = arith.constant 0 : index
    %c0_63 = arith.constant 0 : index
    %99 = vector.load %arg2[%c19, %c0_62, %c0_63] : memref<256x8x128xf32, #tpu.memory_space<vmem>>, vector<1x8x128xf32>
    %100 = vector.shape_cast %99 : vector<1x8x128xf32> to vector<8x128xf32>
    %101 = arith.mulf %11, %100 : vector<8x128xf32>
    %102 = arith.addf %98, %101 : vector<8x128xf32>
    %c20 = arith.constant 20 : index
    %c0_64 = arith.constant 0 : index
    %c0_65 = arith.constant 0 : index
    %103 = vector.load %arg2[%c20, %c0_64, %c0_65] : memref<256x8x128xf32, #tpu.memory_space<vmem>>, vector<1x8x128xf32>
    %104 = vector.shape_cast %103 : vector<1x8x128xf32> to vector<8x128xf32>
    %105 = arith.mulf %14, %104 : vector<8x128xf32>
    %106 = arith.addf %102, %105 : vector<8x128xf32>
    %c21 = arith.constant 21 : index
    %c0_66 = arith.constant 0 : index
    %c0_67 = arith.constant 0 : index
    %107 = vector.load %arg2[%c21, %c0_66, %c0_67] : memref<256x8x128xf32, #tpu.memory_space<vmem>>, vector<1x8x128xf32>
    %108 = vector.shape_cast %107 : vector<1x8x128xf32> to vector<8x128xf32>
    %109 = arith.mulf %17, %108 : vector<8x128xf32>
    %110 = arith.addf %106, %109 : vector<8x128xf32>
    %c22 = arith.constant 22 : index
    %c0_68 = arith.constant 0 : index
    %c0_69 = arith.constant 0 : index
    %111 = vector.load %arg2[%c22, %c0_68, %c0_69] : memref<256x8x128xf32, #tpu.memory_space<vmem>>, vector<1x8x128xf32>
    %112 = vector.shape_cast %111 : vector<1x8x128xf32> to vector<8x128xf32>
    %113 = arith.mulf %20, %112 : vector<8x128xf32>
    %114 = arith.addf %110, %113 : vector<8x128xf32>
    %cst_70 = arith.constant 0.000000e+00 : f32
    %115 = vector.broadcast %cst_70 : f32 to vector<8x128xf32>
    %116 = arith.maximumf %114, %115 : vector<8x128xf32>
    %c31 = arith.constant 31 : index
    %c0_71 = arith.constant 0 : index
    %c0_72 = arith.constant 0 : index
    %117 = vector.load %arg2[%c31, %c0_71, %c0_72] : memref<256x8x128xf32, #tpu.memory_space<vmem>>, vector<1x8x128xf32>
    %118 = vector.shape_cast %117 : vector<1x8x128xf32> to vector<8x128xf32>
    %c24 = arith.constant 24 : index
    %c0_73 = arith.constant 0 : index
    %c0_74 = arith.constant 0 : index
    %119 = vector.load %arg2[%c24, %c0_73, %c0_74] : memref<256x8x128xf32, #tpu.memory_space<vmem>>, vector<1x8x128xf32>
    %120 = vector.shape_cast %119 : vector<1x8x128xf32> to vector<8x128xf32>
    %121 = arith.mulf %2, %120 : vector<8x128xf32>
    %122 = arith.addf %118, %121 : vector<8x128xf32>
    %c25 = arith.constant 25 : index
    %c0_75 = arith.constant 0 : index
    %c0_76 = arith.constant 0 : index
    %123 = vector.load %arg2[%c25, %c0_75, %c0_76] : memref<256x8x128xf32, #tpu.memory_space<vmem>>, vector<1x8x128xf32>
    %124 = vector.shape_cast %123 : vector<1x8x128xf32> to vector<8x128xf32>
    %125 = arith.mulf %5, %124 : vector<8x128xf32>
    %126 = arith.addf %122, %125 : vector<8x128xf32>
    %c26 = arith.constant 26 : index
    %c0_77 = arith.constant 0 : index
    %c0_78 = arith.constant 0 : index
    %127 = vector.load %arg2[%c26, %c0_77, %c0_78] : memref<256x8x128xf32, #tpu.memory_space<vmem>>, vector<1x8x128xf32>
    %128 = vector.shape_cast %127 : vector<1x8x128xf32> to vector<8x128xf32>
    %129 = arith.mulf %8, %128 : vector<8x128xf32>
    %130 = arith.addf %126, %129 : vector<8x128xf32>
    %c27 = arith.constant 27 : index
    %c0_79 = arith.constant 0 : index
    %c0_80 = arith.constant 0 : index
    %131 = vector.load %arg2[%c27, %c0_79, %c0_80] : memref<256x8x128xf32, #tpu.memory_space<vmem>>, vector<1x8x128xf32>
    %132 = vector.shape_cast %131 : vector<1x8x128xf32> to vector<8x128xf32>
    %133 = arith.mulf %11, %132 : vector<8x128xf32>
    %134 = arith.addf %130, %133 : vector<8x128xf32>
    %c28 = arith.constant 28 : index
    %c0_81 = arith.constant 0 : index
    %c0_82 = arith.constant 0 : index
    %135 = vector.load %arg2[%c28, %c0_81, %c0_82] : memref<256x8x128xf32, #tpu.memory_space<vmem>>, vector<1x8x128xf32>
    %136 = vector.shape_cast %135 : vector<1x8x128xf32> to vector<8x128xf32>
    %137 = arith.mulf %14, %136 : vector<8x128xf32>
    %138 = arith.addf %134, %137 : vector<8x128xf32>
    %c29 = arith.constant 29 : index
    %c0_83 = arith.constant 0 : index
    %c0_84 = arith.constant 0 : index
    %139 = vector.load %arg2[%c29, %c0_83, %c0_84] : memref<256x8x128xf32, #tpu.memory_space<vmem>>, vector<1x8x128xf32>
    %140 = vector.shape_cast %139 : vector<1x8x128xf32> to vector<8x128xf32>
    %141 = arith.mulf %17, %140 : vector<8x128xf32>
    %142 = arith.addf %138, %141 : vector<8x128xf32>
    %c30 = arith.constant 30 : index
    %c0_85 = arith.constant 0 : index
    %c0_86 = arith.constant 0 : index
    %143 = vector.load %arg2[%c30, %c0_85, %c0_86] : memref<256x8x128xf32, #tpu.memory_space<vmem>>, vector<1x8x128xf32>
    %144 = vector.shape_cast %143 : vector<1x8x128xf32> to vector<8x128xf32>
    %145 = arith.mulf %20, %144 : vector<8x128xf32>
    %146 = arith.addf %142, %145 : vector<8x128xf32>
    %cst_87 = arith.constant 0.000000e+00 : f32
    %147 = vector.broadcast %cst_87 : f32 to vector<8x128xf32>
    %148 = arith.maximumf %146, %147 : vector<8x128xf32>
    %c39 = arith.constant 39 : index
    %c0_88 = arith.constant 0 : index
    %c0_89 = arith.constant 0 : index
    %149 = vector.load %arg2[%c39, %c0_88, %c0_89] : memref<256x8x128xf32, #tpu.memory_space<vmem>>, vector<1x8x128xf32>
    %150 = vector.shape_cast %149 : vector<1x8x128xf32> to vector<8x128xf32>
    %c32 = arith.constant 32 : index
    %c0_90 = arith.constant 0 : index
    %c0_91 = arith.constant 0 : index
    %151 = vector.load %arg2[%c32, %c0_90, %c0_91] : memref<256x8x128xf32, #tpu.memory_space<vmem>>, vector<1x8x128xf32>
    %152 = vector.shape_cast %151 : vector<1x8x128xf32> to vector<8x128xf32>
    %153 = arith.mulf %2, %152 : vector<8x128xf32>
    %154 = arith.addf %150, %153 : vector<8x128xf32>
    %c33 = arith.constant 33 : index
    %c0_92 = arith.constant 0 : index
    %c0_93 = arith.constant 0 : index
    %155 = vector.load %arg2[%c33, %c0_92, %c0_93] : memref<256x8x128xf32, #tpu.memory_space<vmem>>, vector<1x8x128xf32>
    %156 = vector.shape_cast %155 : vector<1x8x128xf32> to vector<8x128xf32>
    %157 = arith.mulf %5, %156 : vector<8x128xf32>
    %158 = arith.addf %154, %157 : vector<8x128xf32>
    %c34 = arith.constant 34 : index
    %c0_94 = arith.constant 0 : index
    %c0_95 = arith.constant 0 : index
    %159 = vector.load %arg2[%c34, %c0_94, %c0_95] : memref<256x8x128xf32, #tpu.memory_space<vmem>>, vector<1x8x128xf32>
    %160 = vector.shape_cast %159 : vector<1x8x128xf32> to vector<8x128xf32>
    %161 = arith.mulf %8, %160 : vector<8x128xf32>
    %162 = arith.addf %158, %161 : vector<8x128xf32>
    %c35 = arith.constant 35 : index
    %c0_96 = arith.constant 0 : index
    %c0_97 = arith.constant 0 : index
    %163 = vector.load %arg2[%c35, %c0_96, %c0_97] : memref<256x8x128xf32, #tpu.memory_space<vmem>>, vector<1x8x128xf32>
    %164 = vector.shape_cast %163 : vector<1x8x128xf32> to vector<8x128xf32>
    %165 = arith.mulf %11, %164 : vector<8x128xf32>
    %166 = arith.addf %162, %165 : vector<8x128xf32>
    %c36 = arith.constant 36 : index
    %c0_98 = arith.constant 0 : index
    %c0_99 = arith.constant 0 : index
    %167 = vector.load %arg2[%c36, %c0_98, %c0_99] : memref<256x8x128xf32, #tpu.memory_space<vmem>>, vector<1x8x128xf32>
    %168 = vector.shape_cast %167 : vector<1x8x128xf32> to vector<8x128xf32>
    %169 = arith.mulf %14, %168 : vector<8x128xf32>
    %170 = arith.addf %166, %169 : vector<8x128xf32>
    %c37 = arith.constant 37 : index
    %c0_100 = arith.constant 0 : index
    %c0_101 = arith.constant 0 : index
    %171 = vector.load %arg2[%c37, %c0_100, %c0_101] : memref<256x8x128xf32, #tpu.memory_space<vmem>>, vector<1x8x128xf32>
    %172 = vector.shape_cast %171 : vector<1x8x128xf32> to vector<8x128xf32>
    %173 = arith.mulf %17, %172 : vector<8x128xf32>
    %174 = arith.addf %170, %173 : vector<8x128xf32>
    %c38 = arith.constant 38 : index
    %c0_102 = arith.constant 0 : index
    %c0_103 = arith.constant 0 : index
    %175 = vector.load %arg2[%c38, %c0_102, %c0_103] : memref<256x8x128xf32, #tpu.memory_space<vmem>>, vector<1x8x128xf32>
    %176 = vector.shape_cast %175 : vector<1x8x128xf32> to vector<8x128xf32>
    %177 = arith.mulf %20, %176 : vector<8x128xf32>
    %178 = arith.addf %174, %177 : vector<8x128xf32>
    %cst_104 = arith.constant 0.000000e+00 : f32
    %179 = vector.broadcast %cst_104 : f32 to vector<8x128xf32>
    %180 = arith.maximumf %178, %179 : vector<8x128xf32>
    %c47 = arith.constant 47 : index
    %c0_105 = arith.constant 0 : index
    %c0_106 = arith.constant 0 : index
    %181 = vector.load %arg2[%c47, %c0_105, %c0_106] : memref<256x8x128xf32, #tpu.memory_space<vmem>>, vector<1x8x128xf32>
    %182 = vector.shape_cast %181 : vector<1x8x128xf32> to vector<8x128xf32>
    %c40 = arith.constant 40 : index
    %c0_107 = arith.constant 0 : index
    %c0_108 = arith.constant 0 : index
    %183 = vector.load %arg2[%c40, %c0_107, %c0_108] : memref<256x8x128xf32, #tpu.memory_space<vmem>>, vector<1x8x128xf32>
    %184 = vector.shape_cast %183 : vector<1x8x128xf32> to vector<8x128xf32>
    %185 = arith.mulf %2, %184 : vector<8x128xf32>
    %186 = arith.addf %182, %185 : vector<8x128xf32>
    %c41 = arith.constant 41 : index
    %c0_109 = arith.constant 0 : index
    %c0_110 = arith.constant 0 : index
    %187 = vector.load %arg2[%c41, %c0_109, %c0_110] : memref<256x8x128xf32, #tpu.memory_space<vmem>>, vector<1x8x128xf32>
    %188 = vector.shape_cast %187 : vector<1x8x128xf32> to vector<8x128xf32>
    %189 = arith.mulf %5, %188 : vector<8x128xf32>
    %190 = arith.addf %186, %189 : vector<8x128xf32>
    %c42 = arith.constant 42 : index
    %c0_111 = arith.constant 0 : index
    %c0_112 = arith.constant 0 : index
    %191 = vector.load %arg2[%c42, %c0_111, %c0_112] : memref<256x8x128xf32, #tpu.memory_space<vmem>>, vector<1x8x128xf32>
    %192 = vector.shape_cast %191 : vector<1x8x128xf32> to vector<8x128xf32>
    %193 = arith.mulf %8, %192 : vector<8x128xf32>
    %194 = arith.addf %190, %193 : vector<8x128xf32>
    %c43 = arith.constant 43 : index
    %c0_113 = arith.constant 0 : index
    %c0_114 = arith.constant 0 : index
    %195 = vector.load %arg2[%c43, %c0_113, %c0_114] : memref<256x8x128xf32, #tpu.memory_space<vmem>>, vector<1x8x128xf32>
    %196 = vector.shape_cast %195 : vector<1x8x128xf32> to vector<8x128xf32>
    %197 = arith.mulf %11, %196 : vector<8x128xf32>
    %198 = arith.addf %194, %197 : vector<8x128xf32>
    %c44 = arith.constant 44 : index
    %c0_115 = arith.constant 0 : index
    %c0_116 = arith.constant 0 : index
    %199 = vector.load %arg2[%c44, %c0_115, %c0_116] : memref<256x8x128xf32, #tpu.memory_space<vmem>>, vector<1x8x128xf32>
    %200 = vector.shape_cast %199 : vector<1x8x128xf32> to vector<8x128xf32>
    %201 = arith.mulf %14, %200 : vector<8x128xf32>
    %202 = arith.addf %198, %201 : vector<8x128xf32>
    %c45 = arith.constant 45 : index
    %c0_117 = arith.constant 0 : index
    %c0_118 = arith.constant 0 : index
    %203 = vector.load %arg2[%c45, %c0_117, %c0_118] : memref<256x8x128xf32, #tpu.memory_space<vmem>>, vector<1x8x128xf32>
    %204 = vector.shape_cast %203 : vector<1x8x128xf32> to vector<8x128xf32>
    %205 = arith.mulf %17, %204 : vector<8x128xf32>
    %206 = arith.addf %202, %205 : vector<8x128xf32>
    %c46 = arith.constant 46 : index
    %c0_119 = arith.constant 0 : index
    %c0_120 = arith.constant 0 : index
    %207 = vector.load %arg2[%c46, %c0_119, %c0_120] : memref<256x8x128xf32, #tpu.memory_space<vmem>>, vector<1x8x128xf32>
    %208 = vector.shape_cast %207 : vector<1x8x128xf32> to vector<8x128xf32>
    %209 = arith.mulf %20, %208 : vector<8x128xf32>
    %210 = arith.addf %206, %209 : vector<8x128xf32>
    %cst_121 = arith.constant 0.000000e+00 : f32
    %211 = vector.broadcast %cst_121 : f32 to vector<8x128xf32>
    %212 = arith.maximumf %210, %211 : vector<8x128xf32>
    %c55 = arith.constant 55 : index
    %c0_122 = arith.constant 0 : index
    %c0_123 = arith.constant 0 : index
    %213 = vector.load %arg2[%c55, %c0_122, %c0_123] : memref<256x8x128xf32, #tpu.memory_space<vmem>>, vector<1x8x128xf32>
    %214 = vector.shape_cast %213 : vector<1x8x128xf32> to vector<8x128xf32>
    %c48 = arith.constant 48 : index
    %c0_124 = arith.constant 0 : index
    %c0_125 = arith.constant 0 : index
    %215 = vector.load %arg2[%c48, %c0_124, %c0_125] : memref<256x8x128xf32, #tpu.memory_space<vmem>>, vector<1x8x128xf32>
    %216 = vector.shape_cast %215 : vector<1x8x128xf32> to vector<8x128xf32>
    %217 = arith.mulf %2, %216 : vector<8x128xf32>
    %218 = arith.addf %214, %217 : vector<8x128xf32>
    %c49 = arith.constant 49 : index
    %c0_126 = arith.constant 0 : index
    %c0_127 = arith.constant 0 : index
    %219 = vector.load %arg2[%c49, %c0_126, %c0_127] : memref<256x8x128xf32, #tpu.memory_space<vmem>>, vector<1x8x128xf32>
    %220 = vector.shape_cast %219 : vector<1x8x128xf32> to vector<8x128xf32>
    %221 = arith.mulf %5, %220 : vector<8x128xf32>
    %222 = arith.addf %218, %221 : vector<8x128xf32>
    %c50 = arith.constant 50 : index
    %c0_128 = arith.constant 0 : index
    %c0_129 = arith.constant 0 : index
    %223 = vector.load %arg2[%c50, %c0_128, %c0_129] : memref<256x8x128xf32, #tpu.memory_space<vmem>>, vector<1x8x128xf32>
    %224 = vector.shape_cast %223 : vector<1x8x128xf32> to vector<8x128xf32>
    %225 = arith.mulf %8, %224 : vector<8x128xf32>
    %226 = arith.addf %222, %225 : vector<8x128xf32>
    %c51 = arith.constant 51 : index
    %c0_130 = arith.constant 0 : index
    %c0_131 = arith.constant 0 : index
    %227 = vector.load %arg2[%c51, %c0_130, %c0_131] : memref<256x8x128xf32, #tpu.memory_space<vmem>>, vector<1x8x128xf32>
    %228 = vector.shape_cast %227 : vector<1x8x128xf32> to vector<8x128xf32>
    %229 = arith.mulf %11, %228 : vector<8x128xf32>
    %230 = arith.addf %226, %229 : vector<8x128xf32>
    %c52 = arith.constant 52 : index
    %c0_132 = arith.constant 0 : index
    %c0_133 = arith.constant 0 : index
    %231 = vector.load %arg2[%c52, %c0_132, %c0_133] : memref<256x8x128xf32, #tpu.memory_space<vmem>>, vector<1x8x128xf32>
    %232 = vector.shape_cast %231 : vector<1x8x128xf32> to vector<8x128xf32>
    %233 = arith.mulf %14, %232 : vector<8x128xf32>
    %234 = arith.addf %230, %233 : vector<8x128xf32>
    %c53 = arith.constant 53 : index
    %c0_134 = arith.constant 0 : index
    %c0_135 = arith.constant 0 : index
    %235 = vector.load %arg2[%c53, %c0_134, %c0_135] : memref<256x8x128xf32, #tpu.memory_space<vmem>>, vector<1x8x128xf32>
    %236 = vector.shape_cast %235 : vector<1x8x128xf32> to vector<8x128xf32>
    %237 = arith.mulf %17, %236 : vector<8x128xf32>
    %238 = arith.addf %234, %237 : vector<8x128xf32>
    %c54 = arith.constant 54 : index
    %c0_136 = arith.constant 0 : index
    %c0_137 = arith.constant 0 : index
    %239 = vector.load %arg2[%c54, %c0_136, %c0_137] : memref<256x8x128xf32, #tpu.memory_space<vmem>>, vector<1x8x128xf32>
    %240 = vector.shape_cast %239 : vector<1x8x128xf32> to vector<8x128xf32>
    %241 = arith.mulf %20, %240 : vector<8x128xf32>
    %242 = arith.addf %238, %241 : vector<8x128xf32>
    %cst_138 = arith.constant 0.000000e+00 : f32
    %243 = vector.broadcast %cst_138 : f32 to vector<8x128xf32>
    %244 = arith.maximumf %242, %243 : vector<8x128xf32>
    %c71 = arith.constant 71 : index
    %c0_139 = arith.constant 0 : index
    %c0_140 = arith.constant 0 : index
    %245 = vector.load %arg2[%c71, %c0_139, %c0_140] : memref<256x8x128xf32, #tpu.memory_space<vmem>>, vector<1x8x128xf32>
    %246 = vector.shape_cast %245 : vector<1x8x128xf32> to vector<8x128xf32>
    %c64 = arith.constant 64 : index
    %c0_141 = arith.constant 0 : index
    %c0_142 = arith.constant 0 : index
    %247 = vector.load %arg2[%c64, %c0_141, %c0_142] : memref<256x8x128xf32, #tpu.memory_space<vmem>>, vector<1x8x128xf32>
    %248 = vector.shape_cast %247 : vector<1x8x128xf32> to vector<8x128xf32>
    %249 = arith.mulf %52, %248 : vector<8x128xf32>
    %250 = arith.addf %246, %249 : vector<8x128xf32>
    %c65 = arith.constant 65 : index
    %c0_143 = arith.constant 0 : index
    %c0_144 = arith.constant 0 : index
    %251 = vector.load %arg2[%c65, %c0_143, %c0_144] : memref<256x8x128xf32, #tpu.memory_space<vmem>>, vector<1x8x128xf32>
    %252 = vector.shape_cast %251 : vector<1x8x128xf32> to vector<8x128xf32>
    %253 = arith.mulf %84, %252 : vector<8x128xf32>
    %254 = arith.addf %250, %253 : vector<8x128xf32>
    %c66 = arith.constant 66 : index
    %c0_145 = arith.constant 0 : index
    %c0_146 = arith.constant 0 : index
    %255 = vector.load %arg2[%c66, %c0_145, %c0_146] : memref<256x8x128xf32, #tpu.memory_space<vmem>>, vector<1x8x128xf32>
    %256 = vector.shape_cast %255 : vector<1x8x128xf32> to vector<8x128xf32>
    %257 = arith.mulf %116, %256 : vector<8x128xf32>
    %258 = arith.addf %254, %257 : vector<8x128xf32>
    %c67 = arith.constant 67 : index
    %c0_147 = arith.constant 0 : index
    %c0_148 = arith.constant 0 : index
    %259 = vector.load %arg2[%c67, %c0_147, %c0_148] : memref<256x8x128xf32, #tpu.memory_space<vmem>>, vector<1x8x128xf32>
    %260 = vector.shape_cast %259 : vector<1x8x128xf32> to vector<8x128xf32>
    %261 = arith.mulf %148, %260 : vector<8x128xf32>
    %262 = arith.addf %258, %261 : vector<8x128xf32>
    %c68 = arith.constant 68 : index
    %c0_149 = arith.constant 0 : index
    %c0_150 = arith.constant 0 : index
    %263 = vector.load %arg2[%c68, %c0_149, %c0_150] : memref<256x8x128xf32, #tpu.memory_space<vmem>>, vector<1x8x128xf32>
    %264 = vector.shape_cast %263 : vector<1x8x128xf32> to vector<8x128xf32>
    %265 = arith.mulf %180, %264 : vector<8x128xf32>
    %266 = arith.addf %262, %265 : vector<8x128xf32>
    %c69 = arith.constant 69 : index
    %c0_151 = arith.constant 0 : index
    %c0_152 = arith.constant 0 : index
    %267 = vector.load %arg2[%c69, %c0_151, %c0_152] : memref<256x8x128xf32, #tpu.memory_space<vmem>>, vector<1x8x128xf32>
    %268 = vector.shape_cast %267 : vector<1x8x128xf32> to vector<8x128xf32>
    %269 = arith.mulf %212, %268 : vector<8x128xf32>
    %270 = arith.addf %266, %269 : vector<8x128xf32>
    %c70 = arith.constant 70 : index
    %c0_153 = arith.constant 0 : index
    %c0_154 = arith.constant 0 : index
    %271 = vector.load %arg2[%c70, %c0_153, %c0_154] : memref<256x8x128xf32, #tpu.memory_space<vmem>>, vector<1x8x128xf32>
    %272 = vector.shape_cast %271 : vector<1x8x128xf32> to vector<8x128xf32>
    %273 = arith.mulf %244, %272 : vector<8x128xf32>
    %274 = arith.addf %270, %273 : vector<8x128xf32>
    %cst_155 = arith.constant 0.000000e+00 : f32
    %275 = vector.broadcast %cst_155 : f32 to vector<8x128xf32>
    %276 = arith.maximumf %274, %275 : vector<8x128xf32>
    %c79 = arith.constant 79 : index
    %c0_156 = arith.constant 0 : index
    %c0_157 = arith.constant 0 : index
    %277 = vector.load %arg2[%c79, %c0_156, %c0_157] : memref<256x8x128xf32, #tpu.memory_space<vmem>>, vector<1x8x128xf32>
    %278 = vector.shape_cast %277 : vector<1x8x128xf32> to vector<8x128xf32>
    %c72 = arith.constant 72 : index
    %c0_158 = arith.constant 0 : index
    %c0_159 = arith.constant 0 : index
    %279 = vector.load %arg2[%c72, %c0_158, %c0_159] : memref<256x8x128xf32, #tpu.memory_space<vmem>>, vector<1x8x128xf32>
    %280 = vector.shape_cast %279 : vector<1x8x128xf32> to vector<8x128xf32>
    %281 = arith.mulf %52, %280 : vector<8x128xf32>
    %282 = arith.addf %278, %281 : vector<8x128xf32>
    %c73 = arith.constant 73 : index
    %c0_160 = arith.constant 0 : index
    %c0_161 = arith.constant 0 : index
    %283 = vector.load %arg2[%c73, %c0_160, %c0_161] : memref<256x8x128xf32, #tpu.memory_space<vmem>>, vector<1x8x128xf32>
    %284 = vector.shape_cast %283 : vector<1x8x128xf32> to vector<8x128xf32>
    %285 = arith.mulf %84, %284 : vector<8x128xf32>
    %286 = arith.addf %282, %285 : vector<8x128xf32>
    %c74 = arith.constant 74 : index
    %c0_162 = arith.constant 0 : index
    %c0_163 = arith.constant 0 : index
    %287 = vector.load %arg2[%c74, %c0_162, %c0_163] : memref<256x8x128xf32, #tpu.memory_space<vmem>>, vector<1x8x128xf32>
    %288 = vector.shape_cast %287 : vector<1x8x128xf32> to vector<8x128xf32>
    %289 = arith.mulf %116, %288 : vector<8x128xf32>
    %290 = arith.addf %286, %289 : vector<8x128xf32>
    %c75 = arith.constant 75 : index
    %c0_164 = arith.constant 0 : index
    %c0_165 = arith.constant 0 : index
    %291 = vector.load %arg2[%c75, %c0_164, %c0_165] : memref<256x8x128xf32, #tpu.memory_space<vmem>>, vector<1x8x128xf32>
    %292 = vector.shape_cast %291 : vector<1x8x128xf32> to vector<8x128xf32>
    %293 = arith.mulf %148, %292 : vector<8x128xf32>
    %294 = arith.addf %290, %293 : vector<8x128xf32>
    %c76 = arith.constant 76 : index
    %c0_166 = arith.constant 0 : index
    %c0_167 = arith.constant 0 : index
    %295 = vector.load %arg2[%c76, %c0_166, %c0_167] : memref<256x8x128xf32, #tpu.memory_space<vmem>>, vector<1x8x128xf32>
    %296 = vector.shape_cast %295 : vector<1x8x128xf32> to vector<8x128xf32>
    %297 = arith.mulf %180, %296 : vector<8x128xf32>
    %298 = arith.addf %294, %297 : vector<8x128xf32>
    %c77 = arith.constant 77 : index
    %c0_168 = arith.constant 0 : index
    %c0_169 = arith.constant 0 : index
    %299 = vector.load %arg2[%c77, %c0_168, %c0_169] : memref<256x8x128xf32, #tpu.memory_space<vmem>>, vector<1x8x128xf32>
    %300 = vector.shape_cast %299 : vector<1x8x128xf32> to vector<8x128xf32>
    %301 = arith.mulf %212, %300 : vector<8x128xf32>
    %302 = arith.addf %298, %301 : vector<8x128xf32>
    %c78 = arith.constant 78 : index
    %c0_170 = arith.constant 0 : index
    %c0_171 = arith.constant 0 : index
    %303 = vector.load %arg2[%c78, %c0_170, %c0_171] : memref<256x8x128xf32, #tpu.memory_space<vmem>>, vector<1x8x128xf32>
    %304 = vector.shape_cast %303 : vector<1x8x128xf32> to vector<8x128xf32>
    %305 = arith.mulf %244, %304 : vector<8x128xf32>
    %306 = arith.addf %302, %305 : vector<8x128xf32>
    %cst_172 = arith.constant 0.000000e+00 : f32
    %307 = vector.broadcast %cst_172 : f32 to vector<8x128xf32>
    %308 = arith.maximumf %306, %307 : vector<8x128xf32>
    %c87 = arith.constant 87 : index
    %c0_173 = arith.constant 0 : index
    %c0_174 = arith.constant 0 : index
    %309 = vector.load %arg2[%c87, %c0_173, %c0_174] : memref<256x8x128xf32, #tpu.memory_space<vmem>>, vector<1x8x128xf32>
    %310 = vector.shape_cast %309 : vector<1x8x128xf32> to vector<8x128xf32>
    %c80 = arith.constant 80 : index
    %c0_175 = arith.constant 0 : index
    %c0_176 = arith.constant 0 : index
    %311 = vector.load %arg2[%c80, %c0_175, %c0_176] : memref<256x8x128xf32, #tpu.memory_space<vmem>>, vector<1x8x128xf32>
    %312 = vector.shape_cast %311 : vector<1x8x128xf32> to vector<8x128xf32>
    %313 = arith.mulf %52, %312 : vector<8x128xf32>
    %314 = arith.addf %310, %313 : vector<8x128xf32>
    %c81 = arith.constant 81 : index
    %c0_177 = arith.constant 0 : index
    %c0_178 = arith.constant 0 : index
    %315 = vector.load %arg2[%c81, %c0_177, %c0_178] : memref<256x8x128xf32, #tpu.memory_space<vmem>>, vector<1x8x128xf32>
    %316 = vector.shape_cast %315 : vector<1x8x128xf32> to vector<8x128xf32>
    %317 = arith.mulf %84, %316 : vector<8x128xf32>
    %318 = arith.addf %314, %317 : vector<8x128xf32>
    %c82 = arith.constant 82 : index
    %c0_179 = arith.constant 0 : index
    %c0_180 = arith.constant 0 : index
    %319 = vector.load %arg2[%c82, %c0_179, %c0_180] : memref<256x8x128xf32, #tpu.memory_space<vmem>>, vector<1x8x128xf32>
    %320 = vector.shape_cast %319 : vector<1x8x128xf32> to vector<8x128xf32>
    %321 = arith.mulf %116, %320 : vector<8x128xf32>
    %322 = arith.addf %318, %321 : vector<8x128xf32>
    %c83 = arith.constant 83 : index
    %c0_181 = arith.constant 0 : index
    %c0_182 = arith.constant 0 : index
    %323 = vector.load %arg2[%c83, %c0_181, %c0_182] : memref<256x8x128xf32, #tpu.memory_space<vmem>>, vector<1x8x128xf32>
    %324 = vector.shape_cast %323 : vector<1x8x128xf32> to vector<8x128xf32>
    %325 = arith.mulf %148, %324 : vector<8x128xf32>
    %326 = arith.addf %322, %325 : vector<8x128xf32>
    %c84 = arith.constant 84 : index
    %c0_183 = arith.constant 0 : index
    %c0_184 = arith.constant 0 : index
    %327 = vector.load %arg2[%c84, %c0_183, %c0_184] : memref<256x8x128xf32, #tpu.memory_space<vmem>>, vector<1x8x128xf32>
    %328 = vector.shape_cast %327 : vector<1x8x128xf32> to vector<8x128xf32>
    %329 = arith.mulf %180, %328 : vector<8x128xf32>
    %330 = arith.addf %326, %329 : vector<8x128xf32>
    %c85 = arith.constant 85 : index
    %c0_185 = arith.constant 0 : index
    %c0_186 = arith.constant 0 : index
    %331 = vector.load %arg2[%c85, %c0_185, %c0_186] : memref<256x8x128xf32, #tpu.memory_space<vmem>>, vector<1x8x128xf32>
    %332 = vector.shape_cast %331 : vector<1x8x128xf32> to vector<8x128xf32>
    %333 = arith.mulf %212, %332 : vector<8x128xf32>
    %334 = arith.addf %330, %333 : vector<8x128xf32>
    %c86 = arith.constant 86 : index
    %c0_187 = arith.constant 0 : index
    %c0_188 = arith.constant 0 : index
    %335 = vector.load %arg2[%c86, %c0_187, %c0_188] : memref<256x8x128xf32, #tpu.memory_space<vmem>>, vector<1x8x128xf32>
    %336 = vector.shape_cast %335 : vector<1x8x128xf32> to vector<8x128xf32>
    %337 = arith.mulf %244, %336 : vector<8x128xf32>
    %338 = arith.addf %334, %337 : vector<8x128xf32>
    %cst_189 = arith.constant 0.000000e+00 : f32
    %339 = vector.broadcast %cst_189 : f32 to vector<8x128xf32>
    %340 = arith.maximumf %338, %339 : vector<8x128xf32>
    %c95 = arith.constant 95 : index
    %c0_190 = arith.constant 0 : index
    %c0_191 = arith.constant 0 : index
    %341 = vector.load %arg2[%c95, %c0_190, %c0_191] : memref<256x8x128xf32, #tpu.memory_space<vmem>>, vector<1x8x128xf32>
    %342 = vector.shape_cast %341 : vector<1x8x128xf32> to vector<8x128xf32>
    %c88 = arith.constant 88 : index
    %c0_192 = arith.constant 0 : index
    %c0_193 = arith.constant 0 : index
    %343 = vector.load %arg2[%c88, %c0_192, %c0_193] : memref<256x8x128xf32, #tpu.memory_space<vmem>>, vector<1x8x128xf32>
    %344 = vector.shape_cast %343 : vector<1x8x128xf32> to vector<8x128xf32>
    %345 = arith.mulf %52, %344 : vector<8x128xf32>
    %346 = arith.addf %342, %345 : vector<8x128xf32>
    %c89 = arith.constant 89 : index
    %c0_194 = arith.constant 0 : index
    %c0_195 = arith.constant 0 : index
    %347 = vector.load %arg2[%c89, %c0_194, %c0_195] : memref<256x8x128xf32, #tpu.memory_space<vmem>>, vector<1x8x128xf32>
    %348 = vector.shape_cast %347 : vector<1x8x128xf32> to vector<8x128xf32>
    %349 = arith.mulf %84, %348 : vector<8x128xf32>
    %350 = arith.addf %346, %349 : vector<8x128xf32>
    %c90 = arith.constant 90 : index
    %c0_196 = arith.constant 0 : index
    %c0_197 = arith.constant 0 : index
    %351 = vector.load %arg2[%c90, %c0_196, %c0_197] : memref<256x8x128xf32, #tpu.memory_space<vmem>>, vector<1x8x128xf32>
    %352 = vector.shape_cast %351 : vector<1x8x128xf32> to vector<8x128xf32>
    %353 = arith.mulf %116, %352 : vector<8x128xf32>
    %354 = arith.addf %350, %353 : vector<8x128xf32>
    %c91 = arith.constant 91 : index
    %c0_198 = arith.constant 0 : index
    %c0_199 = arith.constant 0 : index
    %355 = vector.load %arg2[%c91, %c0_198, %c0_199] : memref<256x8x128xf32, #tpu.memory_space<vmem>>, vector<1x8x128xf32>
    %356 = vector.shape_cast %355 : vector<1x8x128xf32> to vector<8x128xf32>
    %357 = arith.mulf %148, %356 : vector<8x128xf32>
    %358 = arith.addf %354, %357 : vector<8x128xf32>
    %c92 = arith.constant 92 : index
    %c0_200 = arith.constant 0 : index
    %c0_201 = arith.constant 0 : index
    %359 = vector.load %arg2[%c92, %c0_200, %c0_201] : memref<256x8x128xf32, #tpu.memory_space<vmem>>, vector<1x8x128xf32>
    %360 = vector.shape_cast %359 : vector<1x8x128xf32> to vector<8x128xf32>
    %361 = arith.mulf %180, %360 : vector<8x128xf32>
    %362 = arith.addf %358, %361 : vector<8x128xf32>
    %c93 = arith.constant 93 : index
    %c0_202 = arith.constant 0 : index
    %c0_203 = arith.constant 0 : index
    %363 = vector.load %arg2[%c93, %c0_202, %c0_203] : memref<256x8x128xf32, #tpu.memory_space<vmem>>, vector<1x8x128xf32>
    %364 = vector.shape_cast %363 : vector<1x8x128xf32> to vector<8x128xf32>
    %365 = arith.mulf %212, %364 : vector<8x128xf32>
    %366 = arith.addf %362, %365 : vector<8x128xf32>
    %c94 = arith.constant 94 : index
    %c0_204 = arith.constant 0 : index
    %c0_205 = arith.constant 0 : index
    %367 = vector.load %arg2[%c94, %c0_204, %c0_205] : memref<256x8x128xf32, #tpu.memory_space<vmem>>, vector<1x8x128xf32>
    %368 = vector.shape_cast %367 : vector<1x8x128xf32> to vector<8x128xf32>
    %369 = arith.mulf %244, %368 : vector<8x128xf32>
    %370 = arith.addf %366, %369 : vector<8x128xf32>
    %cst_206 = arith.constant 0.000000e+00 : f32
    %371 = vector.broadcast %cst_206 : f32 to vector<8x128xf32>
    %372 = arith.maximumf %370, %371 : vector<8x128xf32>
    %c103 = arith.constant 103 : index
    %c0_207 = arith.constant 0 : index
    %c0_208 = arith.constant 0 : index
    %373 = vector.load %arg2[%c103, %c0_207, %c0_208] : memref<256x8x128xf32, #tpu.memory_space<vmem>>, vector<1x8x128xf32>
    %374 = vector.shape_cast %373 : vector<1x8x128xf32> to vector<8x128xf32>
    %c96 = arith.constant 96 : index
    %c0_209 = arith.constant 0 : index
    %c0_210 = arith.constant 0 : index
    %375 = vector.load %arg2[%c96, %c0_209, %c0_210] : memref<256x8x128xf32, #tpu.memory_space<vmem>>, vector<1x8x128xf32>
    %376 = vector.shape_cast %375 : vector<1x8x128xf32> to vector<8x128xf32>
    %377 = arith.mulf %52, %376 : vector<8x128xf32>
    %378 = arith.addf %374, %377 : vector<8x128xf32>
    %c97 = arith.constant 97 : index
    %c0_211 = arith.constant 0 : index
    %c0_212 = arith.constant 0 : index
    %379 = vector.load %arg2[%c97, %c0_211, %c0_212] : memref<256x8x128xf32, #tpu.memory_space<vmem>>, vector<1x8x128xf32>
    %380 = vector.shape_cast %379 : vector<1x8x128xf32> to vector<8x128xf32>
    %381 = arith.mulf %84, %380 : vector<8x128xf32>
    %382 = arith.addf %378, %381 : vector<8x128xf32>
    %c98 = arith.constant 98 : index
    %c0_213 = arith.constant 0 : index
    %c0_214 = arith.constant 0 : index
    %383 = vector.load %arg2[%c98, %c0_213, %c0_214] : memref<256x8x128xf32, #tpu.memory_space<vmem>>, vector<1x8x128xf32>
    %384 = vector.shape_cast %383 : vector<1x8x128xf32> to vector<8x128xf32>
    %385 = arith.mulf %116, %384 : vector<8x128xf32>
    %386 = arith.addf %382, %385 : vector<8x128xf32>
    %c99 = arith.constant 99 : index
    %c0_215 = arith.constant 0 : index
    %c0_216 = arith.constant 0 : index
    %387 = vector.load %arg2[%c99, %c0_215, %c0_216] : memref<256x8x128xf32, #tpu.memory_space<vmem>>, vector<1x8x128xf32>
    %388 = vector.shape_cast %387 : vector<1x8x128xf32> to vector<8x128xf32>
    %389 = arith.mulf %148, %388 : vector<8x128xf32>
    %390 = arith.addf %386, %389 : vector<8x128xf32>
    %c100 = arith.constant 100 : index
    %c0_217 = arith.constant 0 : index
    %c0_218 = arith.constant 0 : index
    %391 = vector.load %arg2[%c100, %c0_217, %c0_218] : memref<256x8x128xf32, #tpu.memory_space<vmem>>, vector<1x8x128xf32>
    %392 = vector.shape_cast %391 : vector<1x8x128xf32> to vector<8x128xf32>
    %393 = arith.mulf %180, %392 : vector<8x128xf32>
    %394 = arith.addf %390, %393 : vector<8x128xf32>
    %c101 = arith.constant 101 : index
    %c0_219 = arith.constant 0 : index
    %c0_220 = arith.constant 0 : index
    %395 = vector.load %arg2[%c101, %c0_219, %c0_220] : memref<256x8x128xf32, #tpu.memory_space<vmem>>, vector<1x8x128xf32>
    %396 = vector.shape_cast %395 : vector<1x8x128xf32> to vector<8x128xf32>
    %397 = arith.mulf %212, %396 : vector<8x128xf32>
    %398 = arith.addf %394, %397 : vector<8x128xf32>
    %c102 = arith.constant 102 : index
    %c0_221 = arith.constant 0 : index
    %c0_222 = arith.constant 0 : index
    %399 = vector.load %arg2[%c102, %c0_221, %c0_222] : memref<256x8x128xf32, #tpu.memory_space<vmem>>, vector<1x8x128xf32>
    %400 = vector.shape_cast %399 : vector<1x8x128xf32> to vector<8x128xf32>
    %401 = arith.mulf %244, %400 : vector<8x128xf32>
    %402 = arith.addf %398, %401 : vector<8x128xf32>
    %cst_223 = arith.constant 0.000000e+00 : f32
    %403 = vector.broadcast %cst_223 : f32 to vector<8x128xf32>
    %404 = arith.maximumf %402, %403 : vector<8x128xf32>
    %c111 = arith.constant 111 : index
    %c0_224 = arith.constant 0 : index
    %c0_225 = arith.constant 0 : index
    %405 = vector.load %arg2[%c111, %c0_224, %c0_225] : memref<256x8x128xf32, #tpu.memory_space<vmem>>, vector<1x8x128xf32>
    %406 = vector.shape_cast %405 : vector<1x8x128xf32> to vector<8x128xf32>
    %c104 = arith.constant 104 : index
    %c0_226 = arith.constant 0 : index
    %c0_227 = arith.constant 0 : index
    %407 = vector.load %arg2[%c104, %c0_226, %c0_227] : memref<256x8x128xf32, #tpu.memory_space<vmem>>, vector<1x8x128xf32>
    %408 = vector.shape_cast %407 : vector<1x8x128xf32> to vector<8x128xf32>
    %409 = arith.mulf %52, %408 : vector<8x128xf32>
    %410 = arith.addf %406, %409 : vector<8x128xf32>
    %c105 = arith.constant 105 : index
    %c0_228 = arith.constant 0 : index
    %c0_229 = arith.constant 0 : index
    %411 = vector.load %arg2[%c105, %c0_228, %c0_229] : memref<256x8x128xf32, #tpu.memory_space<vmem>>, vector<1x8x128xf32>
    %412 = vector.shape_cast %411 : vector<1x8x128xf32> to vector<8x128xf32>
    %413 = arith.mulf %84, %412 : vector<8x128xf32>
    %414 = arith.addf %410, %413 : vector<8x128xf32>
    %c106 = arith.constant 106 : index
    %c0_230 = arith.constant 0 : index
    %c0_231 = arith.constant 0 : index
    %415 = vector.load %arg2[%c106, %c0_230, %c0_231] : memref<256x8x128xf32, #tpu.memory_space<vmem>>, vector<1x8x128xf32>
    %416 = vector.shape_cast %415 : vector<1x8x128xf32> to vector<8x128xf32>
    %417 = arith.mulf %116, %416 : vector<8x128xf32>
    %418 = arith.addf %414, %417 : vector<8x128xf32>
    %c107 = arith.constant 107 : index
    %c0_232 = arith.constant 0 : index
    %c0_233 = arith.constant 0 : index
    %419 = vector.load %arg2[%c107, %c0_232, %c0_233] : memref<256x8x128xf32, #tpu.memory_space<vmem>>, vector<1x8x128xf32>
    %420 = vector.shape_cast %419 : vector<1x8x128xf32> to vector<8x128xf32>
    %421 = arith.mulf %148, %420 : vector<8x128xf32>
    %422 = arith.addf %418, %421 : vector<8x128xf32>
    %c108 = arith.constant 108 : index
    %c0_234 = arith.constant 0 : index
    %c0_235 = arith.constant 0 : index
    %423 = vector.load %arg2[%c108, %c0_234, %c0_235] : memref<256x8x128xf32, #tpu.memory_space<vmem>>, vector<1x8x128xf32>
    %424 = vector.shape_cast %423 : vector<1x8x128xf32> to vector<8x128xf32>
    %425 = arith.mulf %180, %424 : vector<8x128xf32>
    %426 = arith.addf %422, %425 : vector<8x128xf32>
    %c109 = arith.constant 109 : index
    %c0_236 = arith.constant 0 : index
    %c0_237 = arith.constant 0 : index
    %427 = vector.load %arg2[%c109, %c0_236, %c0_237] : memref<256x8x128xf32, #tpu.memory_space<vmem>>, vector<1x8x128xf32>
    %428 = vector.shape_cast %427 : vector<1x8x128xf32> to vector<8x128xf32>
    %429 = arith.mulf %212, %428 : vector<8x128xf32>
    %430 = arith.addf %426, %429 : vector<8x128xf32>
    %c110 = arith.constant 110 : index
    %c0_238 = arith.constant 0 : index
    %c0_239 = arith.constant 0 : index
    %431 = vector.load %arg2[%c110, %c0_238, %c0_239] : memref<256x8x128xf32, #tpu.memory_space<vmem>>, vector<1x8x128xf32>
    %432 = vector.shape_cast %431 : vector<1x8x128xf32> to vector<8x128xf32>
    %433 = arith.mulf %244, %432 : vector<8x128xf32>
    %434 = arith.addf %430, %433 : vector<8x128xf32>
    %cst_240 = arith.constant 0.000000e+00 : f32
    %435 = vector.broadcast %cst_240 : f32 to vector<8x128xf32>
    %436 = arith.maximumf %434, %435 : vector<8x128xf32>
    %c119 = arith.constant 119 : index
    %c0_241 = arith.constant 0 : index
    %c0_242 = arith.constant 0 : index
    %437 = vector.load %arg2[%c119, %c0_241, %c0_242] : memref<256x8x128xf32, #tpu.memory_space<vmem>>, vector<1x8x128xf32>
    %438 = vector.shape_cast %437 : vector<1x8x128xf32> to vector<8x128xf32>
    %c112 = arith.constant 112 : index
    %c0_243 = arith.constant 0 : index
    %c0_244 = arith.constant 0 : index
    %439 = vector.load %arg2[%c112, %c0_243, %c0_244] : memref<256x8x128xf32, #tpu.memory_space<vmem>>, vector<1x8x128xf32>
    %440 = vector.shape_cast %439 : vector<1x8x128xf32> to vector<8x128xf32>
    %441 = arith.mulf %52, %440 : vector<8x128xf32>
    %442 = arith.addf %438, %441 : vector<8x128xf32>
    %c113 = arith.constant 113 : index
    %c0_245 = arith.constant 0 : index
    %c0_246 = arith.constant 0 : index
    %443 = vector.load %arg2[%c113, %c0_245, %c0_246] : memref<256x8x128xf32, #tpu.memory_space<vmem>>, vector<1x8x128xf32>
    %444 = vector.shape_cast %443 : vector<1x8x128xf32> to vector<8x128xf32>
    %445 = arith.mulf %84, %444 : vector<8x128xf32>
    %446 = arith.addf %442, %445 : vector<8x128xf32>
    %c114 = arith.constant 114 : index
    %c0_247 = arith.constant 0 : index
    %c0_248 = arith.constant 0 : index
    %447 = vector.load %arg2[%c114, %c0_247, %c0_248] : memref<256x8x128xf32, #tpu.memory_space<vmem>>, vector<1x8x128xf32>
    %448 = vector.shape_cast %447 : vector<1x8x128xf32> to vector<8x128xf32>
    %449 = arith.mulf %116, %448 : vector<8x128xf32>
    %450 = arith.addf %446, %449 : vector<8x128xf32>
    %c115 = arith.constant 115 : index
    %c0_249 = arith.constant 0 : index
    %c0_250 = arith.constant 0 : index
    %451 = vector.load %arg2[%c115, %c0_249, %c0_250] : memref<256x8x128xf32, #tpu.memory_space<vmem>>, vector<1x8x128xf32>
    %452 = vector.shape_cast %451 : vector<1x8x128xf32> to vector<8x128xf32>
    %453 = arith.mulf %148, %452 : vector<8x128xf32>
    %454 = arith.addf %450, %453 : vector<8x128xf32>
    %c116 = arith.constant 116 : index
    %c0_251 = arith.constant 0 : index
    %c0_252 = arith.constant 0 : index
    %455 = vector.load %arg2[%c116, %c0_251, %c0_252] : memref<256x8x128xf32, #tpu.memory_space<vmem>>, vector<1x8x128xf32>
    %456 = vector.shape_cast %455 : vector<1x8x128xf32> to vector<8x128xf32>
    %457 = arith.mulf %180, %456 : vector<8x128xf32>
    %458 = arith.addf %454, %457 : vector<8x128xf32>
    %c117 = arith.constant 117 : index
    %c0_253 = arith.constant 0 : index
    %c0_254 = arith.constant 0 : index
    %459 = vector.load %arg2[%c117, %c0_253, %c0_254] : memref<256x8x128xf32, #tpu.memory_space<vmem>>, vector<1x8x128xf32>
    %460 = vector.shape_cast %459 : vector<1x8x128xf32> to vector<8x128xf32>
    %461 = arith.mulf %212, %460 : vector<8x128xf32>
    %462 = arith.addf %458, %461 : vector<8x128xf32>
    %c118 = arith.constant 118 : index
    %c0_255 = arith.constant 0 : index
    %c0_256 = arith.constant 0 : index
    %463 = vector.load %arg2[%c118, %c0_255, %c0_256] : memref<256x8x128xf32, #tpu.memory_space<vmem>>, vector<1x8x128xf32>
    %464 = vector.shape_cast %463 : vector<1x8x128xf32> to vector<8x128xf32>
    %465 = arith.mulf %244, %464 : vector<8x128xf32>
    %466 = arith.addf %462, %465 : vector<8x128xf32>
    %cst_257 = arith.constant 0.000000e+00 : f32
    %467 = vector.broadcast %cst_257 : f32 to vector<8x128xf32>
    %468 = arith.maximumf %466, %467 : vector<8x128xf32>
    %c135 = arith.constant 135 : index
    %c0_258 = arith.constant 0 : index
    %c0_259 = arith.constant 0 : index
    %469 = vector.load %arg2[%c135, %c0_258, %c0_259] : memref<256x8x128xf32, #tpu.memory_space<vmem>>, vector<1x8x128xf32>
    %470 = vector.shape_cast %469 : vector<1x8x128xf32> to vector<8x128xf32>
    %c128 = arith.constant 128 : index
    %c0_260 = arith.constant 0 : index
    %c0_261 = arith.constant 0 : index
    %471 = vector.load %arg2[%c128, %c0_260, %c0_261] : memref<256x8x128xf32, #tpu.memory_space<vmem>>, vector<1x8x128xf32>
    %472 = vector.shape_cast %471 : vector<1x8x128xf32> to vector<8x128xf32>
    %473 = arith.mulf %276, %472 : vector<8x128xf32>
    %474 = arith.addf %470, %473 : vector<8x128xf32>
    %c129 = arith.constant 129 : index
    %c0_262 = arith.constant 0 : index
    %c0_263 = arith.constant 0 : index
    %475 = vector.load %arg2[%c129, %c0_262, %c0_263] : memref<256x8x128xf32, #tpu.memory_space<vmem>>, vector<1x8x128xf32>
    %476 = vector.shape_cast %475 : vector<1x8x128xf32> to vector<8x128xf32>
    %477 = arith.mulf %308, %476 : vector<8x128xf32>
    %478 = arith.addf %474, %477 : vector<8x128xf32>
    %c130 = arith.constant 130 : index
    %c0_264 = arith.constant 0 : index
    %c0_265 = arith.constant 0 : index
    %479 = vector.load %arg2[%c130, %c0_264, %c0_265] : memref<256x8x128xf32, #tpu.memory_space<vmem>>, vector<1x8x128xf32>
    %480 = vector.shape_cast %479 : vector<1x8x128xf32> to vector<8x128xf32>
    %481 = arith.mulf %340, %480 : vector<8x128xf32>
    %482 = arith.addf %478, %481 : vector<8x128xf32>
    %c131 = arith.constant 131 : index
    %c0_266 = arith.constant 0 : index
    %c0_267 = arith.constant 0 : index
    %483 = vector.load %arg2[%c131, %c0_266, %c0_267] : memref<256x8x128xf32, #tpu.memory_space<vmem>>, vector<1x8x128xf32>
    %484 = vector.shape_cast %483 : vector<1x8x128xf32> to vector<8x128xf32>
    %485 = arith.mulf %372, %484 : vector<8x128xf32>
    %486 = arith.addf %482, %485 : vector<8x128xf32>
    %c132 = arith.constant 132 : index
    %c0_268 = arith.constant 0 : index
    %c0_269 = arith.constant 0 : index
    %487 = vector.load %arg2[%c132, %c0_268, %c0_269] : memref<256x8x128xf32, #tpu.memory_space<vmem>>, vector<1x8x128xf32>
    %488 = vector.shape_cast %487 : vector<1x8x128xf32> to vector<8x128xf32>
    %489 = arith.mulf %404, %488 : vector<8x128xf32>
    %490 = arith.addf %486, %489 : vector<8x128xf32>
    %c133 = arith.constant 133 : index
    %c0_270 = arith.constant 0 : index
    %c0_271 = arith.constant 0 : index
    %491 = vector.load %arg2[%c133, %c0_270, %c0_271] : memref<256x8x128xf32, #tpu.memory_space<vmem>>, vector<1x8x128xf32>
    %492 = vector.shape_cast %491 : vector<1x8x128xf32> to vector<8x128xf32>
    %493 = arith.mulf %436, %492 : vector<8x128xf32>
    %494 = arith.addf %490, %493 : vector<8x128xf32>
    %c134 = arith.constant 134 : index
    %c0_272 = arith.constant 0 : index
    %c0_273 = arith.constant 0 : index
    %495 = vector.load %arg2[%c134, %c0_272, %c0_273] : memref<256x8x128xf32, #tpu.memory_space<vmem>>, vector<1x8x128xf32>
    %496 = vector.shape_cast %495 : vector<1x8x128xf32> to vector<8x128xf32>
    %497 = arith.mulf %468, %496 : vector<8x128xf32>
    %498 = arith.addf %494, %497 : vector<8x128xf32>
    %cst_274 = arith.constant 0.000000e+00 : f32
    %499 = vector.broadcast %cst_274 : f32 to vector<8x128xf32>
    %500 = arith.maximumf %498, %499 : vector<8x128xf32>
    %c143 = arith.constant 143 : index
    %c0_275 = arith.constant 0 : index
    %c0_276 = arith.constant 0 : index
    %501 = vector.load %arg2[%c143, %c0_275, %c0_276] : memref<256x8x128xf32, #tpu.memory_space<vmem>>, vector<1x8x128xf32>
    %502 = vector.shape_cast %501 : vector<1x8x128xf32> to vector<8x128xf32>
    %c136 = arith.constant 136 : index
    %c0_277 = arith.constant 0 : index
    %c0_278 = arith.constant 0 : index
    %503 = vector.load %arg2[%c136, %c0_277, %c0_278] : memref<256x8x128xf32, #tpu.memory_space<vmem>>, vector<1x8x128xf32>
    %504 = vector.shape_cast %503 : vector<1x8x128xf32> to vector<8x128xf32>
    %505 = arith.mulf %276, %504 : vector<8x128xf32>
    %506 = arith.addf %502, %505 : vector<8x128xf32>
    %c137 = arith.constant 137 : index
    %c0_279 = arith.constant 0 : index
    %c0_280 = arith.constant 0 : index
    %507 = vector.load %arg2[%c137, %c0_279, %c0_280] : memref<256x8x128xf32, #tpu.memory_space<vmem>>, vector<1x8x128xf32>
    %508 = vector.shape_cast %507 : vector<1x8x128xf32> to vector<8x128xf32>
    %509 = arith.mulf %308, %508 : vector<8x128xf32>
    %510 = arith.addf %506, %509 : vector<8x128xf32>
    %c138 = arith.constant 138 : index
    %c0_281 = arith.constant 0 : index
    %c0_282 = arith.constant 0 : index
    %511 = vector.load %arg2[%c138, %c0_281, %c0_282] : memref<256x8x128xf32, #tpu.memory_space<vmem>>, vector<1x8x128xf32>
    %512 = vector.shape_cast %511 : vector<1x8x128xf32> to vector<8x128xf32>
    %513 = arith.mulf %340, %512 : vector<8x128xf32>
    %514 = arith.addf %510, %513 : vector<8x128xf32>
    %c139 = arith.constant 139 : index
    %c0_283 = arith.constant 0 : index
    %c0_284 = arith.constant 0 : index
    %515 = vector.load %arg2[%c139, %c0_283, %c0_284] : memref<256x8x128xf32, #tpu.memory_space<vmem>>, vector<1x8x128xf32>
    %516 = vector.shape_cast %515 : vector<1x8x128xf32> to vector<8x128xf32>
    %517 = arith.mulf %372, %516 : vector<8x128xf32>
    %518 = arith.addf %514, %517 : vector<8x128xf32>
    %c140 = arith.constant 140 : index
    %c0_285 = arith.constant 0 : index
    %c0_286 = arith.constant 0 : index
    %519 = vector.load %arg2[%c140, %c0_285, %c0_286] : memref<256x8x128xf32, #tpu.memory_space<vmem>>, vector<1x8x128xf32>
    %520 = vector.shape_cast %519 : vector<1x8x128xf32> to vector<8x128xf32>
    %521 = arith.mulf %404, %520 : vector<8x128xf32>
    %522 = arith.addf %518, %521 : vector<8x128xf32>
    %c141 = arith.constant 141 : index
    %c0_287 = arith.constant 0 : index
    %c0_288 = arith.constant 0 : index
    %523 = vector.load %arg2[%c141, %c0_287, %c0_288] : memref<256x8x128xf32, #tpu.memory_space<vmem>>, vector<1x8x128xf32>
    %524 = vector.shape_cast %523 : vector<1x8x128xf32> to vector<8x128xf32>
    %525 = arith.mulf %436, %524 : vector<8x128xf32>
    %526 = arith.addf %522, %525 : vector<8x128xf32>
    %c142 = arith.constant 142 : index
    %c0_289 = arith.constant 0 : index
    %c0_290 = arith.constant 0 : index
    %527 = vector.load %arg2[%c142, %c0_289, %c0_290] : memref<256x8x128xf32, #tpu.memory_space<vmem>>, vector<1x8x128xf32>
    %528 = vector.shape_cast %527 : vector<1x8x128xf32> to vector<8x128xf32>
    %529 = arith.mulf %468, %528 : vector<8x128xf32>
    %530 = arith.addf %526, %529 : vector<8x128xf32>
    %cst_291 = arith.constant 0.000000e+00 : f32
    %531 = vector.broadcast %cst_291 : f32 to vector<8x128xf32>
    %532 = arith.maximumf %530, %531 : vector<8x128xf32>
    %c151 = arith.constant 151 : index
    %c0_292 = arith.constant 0 : index
    %c0_293 = arith.constant 0 : index
    %533 = vector.load %arg2[%c151, %c0_292, %c0_293] : memref<256x8x128xf32, #tpu.memory_space<vmem>>, vector<1x8x128xf32>
    %534 = vector.shape_cast %533 : vector<1x8x128xf32> to vector<8x128xf32>
    %c144 = arith.constant 144 : index
    %c0_294 = arith.constant 0 : index
    %c0_295 = arith.constant 0 : index
    %535 = vector.load %arg2[%c144, %c0_294, %c0_295] : memref<256x8x128xf32, #tpu.memory_space<vmem>>, vector<1x8x128xf32>
    %536 = vector.shape_cast %535 : vector<1x8x128xf32> to vector<8x128xf32>
    %537 = arith.mulf %276, %536 : vector<8x128xf32>
    %538 = arith.addf %534, %537 : vector<8x128xf32>
    %c145 = arith.constant 145 : index
    %c0_296 = arith.constant 0 : index
    %c0_297 = arith.constant 0 : index
    %539 = vector.load %arg2[%c145, %c0_296, %c0_297] : memref<256x8x128xf32, #tpu.memory_space<vmem>>, vector<1x8x128xf32>
    %540 = vector.shape_cast %539 : vector<1x8x128xf32> to vector<8x128xf32>
    %541 = arith.mulf %308, %540 : vector<8x128xf32>
    %542 = arith.addf %538, %541 : vector<8x128xf32>
    %c146 = arith.constant 146 : index
    %c0_298 = arith.constant 0 : index
    %c0_299 = arith.constant 0 : index
    %543 = vector.load %arg2[%c146, %c0_298, %c0_299] : memref<256x8x128xf32, #tpu.memory_space<vmem>>, vector<1x8x128xf32>
    %544 = vector.shape_cast %543 : vector<1x8x128xf32> to vector<8x128xf32>
    %545 = arith.mulf %340, %544 : vector<8x128xf32>
    %546 = arith.addf %542, %545 : vector<8x128xf32>
    %c147 = arith.constant 147 : index
    %c0_300 = arith.constant 0 : index
    %c0_301 = arith.constant 0 : index
    %547 = vector.load %arg2[%c147, %c0_300, %c0_301] : memref<256x8x128xf32, #tpu.memory_space<vmem>>, vector<1x8x128xf32>
    %548 = vector.shape_cast %547 : vector<1x8x128xf32> to vector<8x128xf32>
    %549 = arith.mulf %372, %548 : vector<8x128xf32>
    %550 = arith.addf %546, %549 : vector<8x128xf32>
    %c148 = arith.constant 148 : index
    %c0_302 = arith.constant 0 : index
    %c0_303 = arith.constant 0 : index
    %551 = vector.load %arg2[%c148, %c0_302, %c0_303] : memref<256x8x128xf32, #tpu.memory_space<vmem>>, vector<1x8x128xf32>
    %552 = vector.shape_cast %551 : vector<1x8x128xf32> to vector<8x128xf32>
    %553 = arith.mulf %404, %552 : vector<8x128xf32>
    %554 = arith.addf %550, %553 : vector<8x128xf32>
    %c149 = arith.constant 149 : index
    %c0_304 = arith.constant 0 : index
    %c0_305 = arith.constant 0 : index
    %555 = vector.load %arg2[%c149, %c0_304, %c0_305] : memref<256x8x128xf32, #tpu.memory_space<vmem>>, vector<1x8x128xf32>
    %556 = vector.shape_cast %555 : vector<1x8x128xf32> to vector<8x128xf32>
    %557 = arith.mulf %436, %556 : vector<8x128xf32>
    %558 = arith.addf %554, %557 : vector<8x128xf32>
    %c150 = arith.constant 150 : index
    %c0_306 = arith.constant 0 : index
    %c0_307 = arith.constant 0 : index
    %559 = vector.load %arg2[%c150, %c0_306, %c0_307] : memref<256x8x128xf32, #tpu.memory_space<vmem>>, vector<1x8x128xf32>
    %560 = vector.shape_cast %559 : vector<1x8x128xf32> to vector<8x128xf32>
    %561 = arith.mulf %468, %560 : vector<8x128xf32>
    %562 = arith.addf %558, %561 : vector<8x128xf32>
    %cst_308 = arith.constant 0.000000e+00 : f32
    %563 = vector.broadcast %cst_308 : f32 to vector<8x128xf32>
    %564 = arith.maximumf %562, %563 : vector<8x128xf32>
    %c159 = arith.constant 159 : index
    %c0_309 = arith.constant 0 : index
    %c0_310 = arith.constant 0 : index
    %565 = vector.load %arg2[%c159, %c0_309, %c0_310] : memref<256x8x128xf32, #tpu.memory_space<vmem>>, vector<1x8x128xf32>
    %566 = vector.shape_cast %565 : vector<1x8x128xf32> to vector<8x128xf32>
    %c152 = arith.constant 152 : index
    %c0_311 = arith.constant 0 : index
    %c0_312 = arith.constant 0 : index
    %567 = vector.load %arg2[%c152, %c0_311, %c0_312] : memref<256x8x128xf32, #tpu.memory_space<vmem>>, vector<1x8x128xf32>
    %568 = vector.shape_cast %567 : vector<1x8x128xf32> to vector<8x128xf32>
    %569 = arith.mulf %276, %568 : vector<8x128xf32>
    %570 = arith.addf %566, %569 : vector<8x128xf32>
    %c153 = arith.constant 153 : index
    %c0_313 = arith.constant 0 : index
    %c0_314 = arith.constant 0 : index
    %571 = vector.load %arg2[%c153, %c0_313, %c0_314] : memref<256x8x128xf32, #tpu.memory_space<vmem>>, vector<1x8x128xf32>
    %572 = vector.shape_cast %571 : vector<1x8x128xf32> to vector<8x128xf32>
    %573 = arith.mulf %308, %572 : vector<8x128xf32>
    %574 = arith.addf %570, %573 : vector<8x128xf32>
    %c154 = arith.constant 154 : index
    %c0_315 = arith.constant 0 : index
    %c0_316 = arith.constant 0 : index
    %575 = vector.load %arg2[%c154, %c0_315, %c0_316] : memref<256x8x128xf32, #tpu.memory_space<vmem>>, vector<1x8x128xf32>
    %576 = vector.shape_cast %575 : vector<1x8x128xf32> to vector<8x128xf32>
    %577 = arith.mulf %340, %576 : vector<8x128xf32>
    %578 = arith.addf %574, %577 : vector<8x128xf32>
    %c155 = arith.constant 155 : index
    %c0_317 = arith.constant 0 : index
    %c0_318 = arith.constant 0 : index
    %579 = vector.load %arg2[%c155, %c0_317, %c0_318] : memref<256x8x128xf32, #tpu.memory_space<vmem>>, vector<1x8x128xf32>
    %580 = vector.shape_cast %579 : vector<1x8x128xf32> to vector<8x128xf32>
    %581 = arith.mulf %372, %580 : vector<8x128xf32>
    %582 = arith.addf %578, %581 : vector<8x128xf32>
    %c156 = arith.constant 156 : index
    %c0_319 = arith.constant 0 : index
    %c0_320 = arith.constant 0 : index
    %583 = vector.load %arg2[%c156, %c0_319, %c0_320] : memref<256x8x128xf32, #tpu.memory_space<vmem>>, vector<1x8x128xf32>
    %584 = vector.shape_cast %583 : vector<1x8x128xf32> to vector<8x128xf32>
    %585 = arith.mulf %404, %584 : vector<8x128xf32>
    %586 = arith.addf %582, %585 : vector<8x128xf32>
    %c157 = arith.constant 157 : index
    %c0_321 = arith.constant 0 : index
    %c0_322 = arith.constant 0 : index
    %587 = vector.load %arg2[%c157, %c0_321, %c0_322] : memref<256x8x128xf32, #tpu.memory_space<vmem>>, vector<1x8x128xf32>
    %588 = vector.shape_cast %587 : vector<1x8x128xf32> to vector<8x128xf32>
    %589 = arith.mulf %436, %588 : vector<8x128xf32>
    %590 = arith.addf %586, %589 : vector<8x128xf32>
    %c158 = arith.constant 158 : index
    %c0_323 = arith.constant 0 : index
    %c0_324 = arith.constant 0 : index
    %591 = vector.load %arg2[%c158, %c0_323, %c0_324] : memref<256x8x128xf32, #tpu.memory_space<vmem>>, vector<1x8x128xf32>
    %592 = vector.shape_cast %591 : vector<1x8x128xf32> to vector<8x128xf32>
    %593 = arith.mulf %468, %592 : vector<8x128xf32>
    %594 = arith.addf %590, %593 : vector<8x128xf32>
    %cst_325 = arith.constant 0.000000e+00 : f32
    %595 = vector.broadcast %cst_325 : f32 to vector<8x128xf32>
    %596 = arith.maximumf %594, %595 : vector<8x128xf32>
    %c167 = arith.constant 167 : index
    %c0_326 = arith.constant 0 : index
    %c0_327 = arith.constant 0 : index
    %597 = vector.load %arg2[%c167, %c0_326, %c0_327] : memref<256x8x128xf32, #tpu.memory_space<vmem>>, vector<1x8x128xf32>
    %598 = vector.shape_cast %597 : vector<1x8x128xf32> to vector<8x128xf32>
    %c160 = arith.constant 160 : index
    %c0_328 = arith.constant 0 : index
    %c0_329 = arith.constant 0 : index
    %599 = vector.load %arg2[%c160, %c0_328, %c0_329] : memref<256x8x128xf32, #tpu.memory_space<vmem>>, vector<1x8x128xf32>
    %600 = vector.shape_cast %599 : vector<1x8x128xf32> to vector<8x128xf32>
    %601 = arith.mulf %276, %600 : vector<8x128xf32>
    %602 = arith.addf %598, %601 : vector<8x128xf32>
    %c161 = arith.constant 161 : index
    %c0_330 = arith.constant 0 : index
    %c0_331 = arith.constant 0 : index
    %603 = vector.load %arg2[%c161, %c0_330, %c0_331] : memref<256x8x128xf32, #tpu.memory_space<vmem>>, vector<1x8x128xf32>
    %604 = vector.shape_cast %603 : vector<1x8x128xf32> to vector<8x128xf32>
    %605 = arith.mulf %308, %604 : vector<8x128xf32>
    %606 = arith.addf %602, %605 : vector<8x128xf32>
    %c162 = arith.constant 162 : index
    %c0_332 = arith.constant 0 : index
    %c0_333 = arith.constant 0 : index
    %607 = vector.load %arg2[%c162, %c0_332, %c0_333] : memref<256x8x128xf32, #tpu.memory_space<vmem>>, vector<1x8x128xf32>
    %608 = vector.shape_cast %607 : vector<1x8x128xf32> to vector<8x128xf32>
    %609 = arith.mulf %340, %608 : vector<8x128xf32>
    %610 = arith.addf %606, %609 : vector<8x128xf32>
    %c163 = arith.constant 163 : index
    %c0_334 = arith.constant 0 : index
    %c0_335 = arith.constant 0 : index
    %611 = vector.load %arg2[%c163, %c0_334, %c0_335] : memref<256x8x128xf32, #tpu.memory_space<vmem>>, vector<1x8x128xf32>
    %612 = vector.shape_cast %611 : vector<1x8x128xf32> to vector<8x128xf32>
    %613 = arith.mulf %372, %612 : vector<8x128xf32>
    %614 = arith.addf %610, %613 : vector<8x128xf32>
    %c164 = arith.constant 164 : index
    %c0_336 = arith.constant 0 : index
    %c0_337 = arith.constant 0 : index
    %615 = vector.load %arg2[%c164, %c0_336, %c0_337] : memref<256x8x128xf32, #tpu.memory_space<vmem>>, vector<1x8x128xf32>
    %616 = vector.shape_cast %615 : vector<1x8x128xf32> to vector<8x128xf32>
    %617 = arith.mulf %404, %616 : vector<8x128xf32>
    %618 = arith.addf %614, %617 : vector<8x128xf32>
    %c165 = arith.constant 165 : index
    %c0_338 = arith.constant 0 : index
    %c0_339 = arith.constant 0 : index
    %619 = vector.load %arg2[%c165, %c0_338, %c0_339] : memref<256x8x128xf32, #tpu.memory_space<vmem>>, vector<1x8x128xf32>
    %620 = vector.shape_cast %619 : vector<1x8x128xf32> to vector<8x128xf32>
    %621 = arith.mulf %436, %620 : vector<8x128xf32>
    %622 = arith.addf %618, %621 : vector<8x128xf32>
    %c166 = arith.constant 166 : index
    %c0_340 = arith.constant 0 : index
    %c0_341 = arith.constant 0 : index
    %623 = vector.load %arg2[%c166, %c0_340, %c0_341] : memref<256x8x128xf32, #tpu.memory_space<vmem>>, vector<1x8x128xf32>
    %624 = vector.shape_cast %623 : vector<1x8x128xf32> to vector<8x128xf32>
    %625 = arith.mulf %468, %624 : vector<8x128xf32>
    %626 = arith.addf %622, %625 : vector<8x128xf32>
    %cst_342 = arith.constant 0.000000e+00 : f32
    %627 = vector.broadcast %cst_342 : f32 to vector<8x128xf32>
    %628 = arith.maximumf %626, %627 : vector<8x128xf32>
    %c175 = arith.constant 175 : index
    %c0_343 = arith.constant 0 : index
    %c0_344 = arith.constant 0 : index
    %629 = vector.load %arg2[%c175, %c0_343, %c0_344] : memref<256x8x128xf32, #tpu.memory_space<vmem>>, vector<1x8x128xf32>
    %630 = vector.shape_cast %629 : vector<1x8x128xf32> to vector<8x128xf32>
    %c168 = arith.constant 168 : index
    %c0_345 = arith.constant 0 : index
    %c0_346 = arith.constant 0 : index
    %631 = vector.load %arg2[%c168, %c0_345, %c0_346] : memref<256x8x128xf32, #tpu.memory_space<vmem>>, vector<1x8x128xf32>
    %632 = vector.shape_cast %631 : vector<1x8x128xf32> to vector<8x128xf32>
    %633 = arith.mulf %276, %632 : vector<8x128xf32>
    %634 = arith.addf %630, %633 : vector<8x128xf32>
    %c169 = arith.constant 169 : index
    %c0_347 = arith.constant 0 : index
    %c0_348 = arith.constant 0 : index
    %635 = vector.load %arg2[%c169, %c0_347, %c0_348] : memref<256x8x128xf32, #tpu.memory_space<vmem>>, vector<1x8x128xf32>
    %636 = vector.shape_cast %635 : vector<1x8x128xf32> to vector<8x128xf32>
    %637 = arith.mulf %308, %636 : vector<8x128xf32>
    %638 = arith.addf %634, %637 : vector<8x128xf32>
    %c170 = arith.constant 170 : index
    %c0_349 = arith.constant 0 : index
    %c0_350 = arith.constant 0 : index
    %639 = vector.load %arg2[%c170, %c0_349, %c0_350] : memref<256x8x128xf32, #tpu.memory_space<vmem>>, vector<1x8x128xf32>
    %640 = vector.shape_cast %639 : vector<1x8x128xf32> to vector<8x128xf32>
    %641 = arith.mulf %340, %640 : vector<8x128xf32>
    %642 = arith.addf %638, %641 : vector<8x128xf32>
    %c171 = arith.constant 171 : index
    %c0_351 = arith.constant 0 : index
    %c0_352 = arith.constant 0 : index
    %643 = vector.load %arg2[%c171, %c0_351, %c0_352] : memref<256x8x128xf32, #tpu.memory_space<vmem>>, vector<1x8x128xf32>
    %644 = vector.shape_cast %643 : vector<1x8x128xf32> to vector<8x128xf32>
    %645 = arith.mulf %372, %644 : vector<8x128xf32>
    %646 = arith.addf %642, %645 : vector<8x128xf32>
    %c172 = arith.constant 172 : index
    %c0_353 = arith.constant 0 : index
    %c0_354 = arith.constant 0 : index
    %647 = vector.load %arg2[%c172, %c0_353, %c0_354] : memref<256x8x128xf32, #tpu.memory_space<vmem>>, vector<1x8x128xf32>
    %648 = vector.shape_cast %647 : vector<1x8x128xf32> to vector<8x128xf32>
    %649 = arith.mulf %404, %648 : vector<8x128xf32>
    %650 = arith.addf %646, %649 : vector<8x128xf32>
    %c173 = arith.constant 173 : index
    %c0_355 = arith.constant 0 : index
    %c0_356 = arith.constant 0 : index
    %651 = vector.load %arg2[%c173, %c0_355, %c0_356] : memref<256x8x128xf32, #tpu.memory_space<vmem>>, vector<1x8x128xf32>
    %652 = vector.shape_cast %651 : vector<1x8x128xf32> to vector<8x128xf32>
    %653 = arith.mulf %436, %652 : vector<8x128xf32>
    %654 = arith.addf %650, %653 : vector<8x128xf32>
    %c174 = arith.constant 174 : index
    %c0_357 = arith.constant 0 : index
    %c0_358 = arith.constant 0 : index
    %655 = vector.load %arg2[%c174, %c0_357, %c0_358] : memref<256x8x128xf32, #tpu.memory_space<vmem>>, vector<1x8x128xf32>
    %656 = vector.shape_cast %655 : vector<1x8x128xf32> to vector<8x128xf32>
    %657 = arith.mulf %468, %656 : vector<8x128xf32>
    %658 = arith.addf %654, %657 : vector<8x128xf32>
    %cst_359 = arith.constant 0.000000e+00 : f32
    %659 = vector.broadcast %cst_359 : f32 to vector<8x128xf32>
    %660 = arith.maximumf %658, %659 : vector<8x128xf32>
    %c183 = arith.constant 183 : index
    %c0_360 = arith.constant 0 : index
    %c0_361 = arith.constant 0 : index
    %661 = vector.load %arg2[%c183, %c0_360, %c0_361] : memref<256x8x128xf32, #tpu.memory_space<vmem>>, vector<1x8x128xf32>
    %662 = vector.shape_cast %661 : vector<1x8x128xf32> to vector<8x128xf32>
    %c176 = arith.constant 176 : index
    %c0_362 = arith.constant 0 : index
    %c0_363 = arith.constant 0 : index
    %663 = vector.load %arg2[%c176, %c0_362, %c0_363] : memref<256x8x128xf32, #tpu.memory_space<vmem>>, vector<1x8x128xf32>
    %664 = vector.shape_cast %663 : vector<1x8x128xf32> to vector<8x128xf32>
    %665 = arith.mulf %276, %664 : vector<8x128xf32>
    %666 = arith.addf %662, %665 : vector<8x128xf32>
    %c177 = arith.constant 177 : index
    %c0_364 = arith.constant 0 : index
    %c0_365 = arith.constant 0 : index
    %667 = vector.load %arg2[%c177, %c0_364, %c0_365] : memref<256x8x128xf32, #tpu.memory_space<vmem>>, vector<1x8x128xf32>
    %668 = vector.shape_cast %667 : vector<1x8x128xf32> to vector<8x128xf32>
    %669 = arith.mulf %308, %668 : vector<8x128xf32>
    %670 = arith.addf %666, %669 : vector<8x128xf32>
    %c178 = arith.constant 178 : index
    %c0_366 = arith.constant 0 : index
    %c0_367 = arith.constant 0 : index
    %671 = vector.load %arg2[%c178, %c0_366, %c0_367] : memref<256x8x128xf32, #tpu.memory_space<vmem>>, vector<1x8x128xf32>
    %672 = vector.shape_cast %671 : vector<1x8x128xf32> to vector<8x128xf32>
    %673 = arith.mulf %340, %672 : vector<8x128xf32>
    %674 = arith.addf %670, %673 : vector<8x128xf32>
    %c179 = arith.constant 179 : index
    %c0_368 = arith.constant 0 : index
    %c0_369 = arith.constant 0 : index
    %675 = vector.load %arg2[%c179, %c0_368, %c0_369] : memref<256x8x128xf32, #tpu.memory_space<vmem>>, vector<1x8x128xf32>
    %676 = vector.shape_cast %675 : vector<1x8x128xf32> to vector<8x128xf32>
    %677 = arith.mulf %372, %676 : vector<8x128xf32>
    %678 = arith.addf %674, %677 : vector<8x128xf32>
    %c180 = arith.constant 180 : index
    %c0_370 = arith.constant 0 : index
    %c0_371 = arith.constant 0 : index
    %679 = vector.load %arg2[%c180, %c0_370, %c0_371] : memref<256x8x128xf32, #tpu.memory_space<vmem>>, vector<1x8x128xf32>
    %680 = vector.shape_cast %679 : vector<1x8x128xf32> to vector<8x128xf32>
    %681 = arith.mulf %404, %680 : vector<8x128xf32>
    %682 = arith.addf %678, %681 : vector<8x128xf32>
    %c181 = arith.constant 181 : index
    %c0_372 = arith.constant 0 : index
    %c0_373 = arith.constant 0 : index
    %683 = vector.load %arg2[%c181, %c0_372, %c0_373] : memref<256x8x128xf32, #tpu.memory_space<vmem>>, vector<1x8x128xf32>
    %684 = vector.shape_cast %683 : vector<1x8x128xf32> to vector<8x128xf32>
    %685 = arith.mulf %436, %684 : vector<8x128xf32>
    %686 = arith.addf %682, %685 : vector<8x128xf32>
    %c182 = arith.constant 182 : index
    %c0_374 = arith.constant 0 : index
    %c0_375 = arith.constant 0 : index
    %687 = vector.load %arg2[%c182, %c0_374, %c0_375] : memref<256x8x128xf32, #tpu.memory_space<vmem>>, vector<1x8x128xf32>
    %688 = vector.shape_cast %687 : vector<1x8x128xf32> to vector<8x128xf32>
    %689 = arith.mulf %468, %688 : vector<8x128xf32>
    %690 = arith.addf %686, %689 : vector<8x128xf32>
    %cst_376 = arith.constant 0.000000e+00 : f32
    %691 = vector.broadcast %cst_376 : f32 to vector<8x128xf32>
    %692 = arith.maximumf %690, %691 : vector<8x128xf32>
    %c199 = arith.constant 199 : index
    %c0_377 = arith.constant 0 : index
    %c0_378 = arith.constant 0 : index
    %693 = vector.load %arg2[%c199, %c0_377, %c0_378] : memref<256x8x128xf32, #tpu.memory_space<vmem>>, vector<1x8x128xf32>
    %694 = vector.shape_cast %693 : vector<1x8x128xf32> to vector<8x128xf32>
    %c192 = arith.constant 192 : index
    %c0_379 = arith.constant 0 : index
    %c0_380 = arith.constant 0 : index
    %695 = vector.load %arg2[%c192, %c0_379, %c0_380] : memref<256x8x128xf32, #tpu.memory_space<vmem>>, vector<1x8x128xf32>
    %696 = vector.shape_cast %695 : vector<1x8x128xf32> to vector<8x128xf32>
    %697 = arith.mulf %500, %696 : vector<8x128xf32>
    %698 = arith.addf %694, %697 : vector<8x128xf32>
    %c193 = arith.constant 193 : index
    %c0_381 = arith.constant 0 : index
    %c0_382 = arith.constant 0 : index
    %699 = vector.load %arg2[%c193, %c0_381, %c0_382] : memref<256x8x128xf32, #tpu.memory_space<vmem>>, vector<1x8x128xf32>
    %700 = vector.shape_cast %699 : vector<1x8x128xf32> to vector<8x128xf32>
    %701 = arith.mulf %532, %700 : vector<8x128xf32>
    %702 = arith.addf %698, %701 : vector<8x128xf32>
    %c194 = arith.constant 194 : index
    %c0_383 = arith.constant 0 : index
    %c0_384 = arith.constant 0 : index
    %703 = vector.load %arg2[%c194, %c0_383, %c0_384] : memref<256x8x128xf32, #tpu.memory_space<vmem>>, vector<1x8x128xf32>
    %704 = vector.shape_cast %703 : vector<1x8x128xf32> to vector<8x128xf32>
    %705 = arith.mulf %564, %704 : vector<8x128xf32>
    %706 = arith.addf %702, %705 : vector<8x128xf32>
    %c195 = arith.constant 195 : index
    %c0_385 = arith.constant 0 : index
    %c0_386 = arith.constant 0 : index
    %707 = vector.load %arg2[%c195, %c0_385, %c0_386] : memref<256x8x128xf32, #tpu.memory_space<vmem>>, vector<1x8x128xf32>
    %708 = vector.shape_cast %707 : vector<1x8x128xf32> to vector<8x128xf32>
    %709 = arith.mulf %596, %708 : vector<8x128xf32>
    %710 = arith.addf %706, %709 : vector<8x128xf32>
    %c196 = arith.constant 196 : index
    %c0_387 = arith.constant 0 : index
    %c0_388 = arith.constant 0 : index
    %711 = vector.load %arg2[%c196, %c0_387, %c0_388] : memref<256x8x128xf32, #tpu.memory_space<vmem>>, vector<1x8x128xf32>
    %712 = vector.shape_cast %711 : vector<1x8x128xf32> to vector<8x128xf32>
    %713 = arith.mulf %628, %712 : vector<8x128xf32>
    %714 = arith.addf %710, %713 : vector<8x128xf32>
    %c197 = arith.constant 197 : index
    %c0_389 = arith.constant 0 : index
    %c0_390 = arith.constant 0 : index
    %715 = vector.load %arg2[%c197, %c0_389, %c0_390] : memref<256x8x128xf32, #tpu.memory_space<vmem>>, vector<1x8x128xf32>
    %716 = vector.shape_cast %715 : vector<1x8x128xf32> to vector<8x128xf32>
    %717 = arith.mulf %660, %716 : vector<8x128xf32>
    %718 = arith.addf %714, %717 : vector<8x128xf32>
    %c198 = arith.constant 198 : index
    %c0_391 = arith.constant 0 : index
    %c0_392 = arith.constant 0 : index
    %719 = vector.load %arg2[%c198, %c0_391, %c0_392] : memref<256x8x128xf32, #tpu.memory_space<vmem>>, vector<1x8x128xf32>
    %720 = vector.shape_cast %719 : vector<1x8x128xf32> to vector<8x128xf32>
    %721 = arith.mulf %692, %720 : vector<8x128xf32>
    %722 = arith.addf %718, %721 : vector<8x128xf32>
    %cst_393 = arith.constant 0.000000e+00 : f32
    %723 = vector.broadcast %cst_393 : f32 to vector<8x128xf32>
    %724 = arith.maximumf %722, %723 : vector<8x128xf32>
    %c207 = arith.constant 207 : index
    %c0_394 = arith.constant 0 : index
    %c0_395 = arith.constant 0 : index
    %725 = vector.load %arg2[%c207, %c0_394, %c0_395] : memref<256x8x128xf32, #tpu.memory_space<vmem>>, vector<1x8x128xf32>
    %726 = vector.shape_cast %725 : vector<1x8x128xf32> to vector<8x128xf32>
    %c200 = arith.constant 200 : index
    %c0_396 = arith.constant 0 : index
    %c0_397 = arith.constant 0 : index
    %727 = vector.load %arg2[%c200, %c0_396, %c0_397] : memref<256x8x128xf32, #tpu.memory_space<vmem>>, vector<1x8x128xf32>
    %728 = vector.shape_cast %727 : vector<1x8x128xf32> to vector<8x128xf32>
    %729 = arith.mulf %500, %728 : vector<8x128xf32>
    %730 = arith.addf %726, %729 : vector<8x128xf32>
    %c201 = arith.constant 201 : index
    %c0_398 = arith.constant 0 : index
    %c0_399 = arith.constant 0 : index
    %731 = vector.load %arg2[%c201, %c0_398, %c0_399] : memref<256x8x128xf32, #tpu.memory_space<vmem>>, vector<1x8x128xf32>
    %732 = vector.shape_cast %731 : vector<1x8x128xf32> to vector<8x128xf32>
    %733 = arith.mulf %532, %732 : vector<8x128xf32>
    %734 = arith.addf %730, %733 : vector<8x128xf32>
    %c202 = arith.constant 202 : index
    %c0_400 = arith.constant 0 : index
    %c0_401 = arith.constant 0 : index
    %735 = vector.load %arg2[%c202, %c0_400, %c0_401] : memref<256x8x128xf32, #tpu.memory_space<vmem>>, vector<1x8x128xf32>
    %736 = vector.shape_cast %735 : vector<1x8x128xf32> to vector<8x128xf32>
    %737 = arith.mulf %564, %736 : vector<8x128xf32>
    %738 = arith.addf %734, %737 : vector<8x128xf32>
    %c203 = arith.constant 203 : index
    %c0_402 = arith.constant 0 : index
    %c0_403 = arith.constant 0 : index
    %739 = vector.load %arg2[%c203, %c0_402, %c0_403] : memref<256x8x128xf32, #tpu.memory_space<vmem>>, vector<1x8x128xf32>
    %740 = vector.shape_cast %739 : vector<1x8x128xf32> to vector<8x128xf32>
    %741 = arith.mulf %596, %740 : vector<8x128xf32>
    %742 = arith.addf %738, %741 : vector<8x128xf32>
    %c204 = arith.constant 204 : index
    %c0_404 = arith.constant 0 : index
    %c0_405 = arith.constant 0 : index
    %743 = vector.load %arg2[%c204, %c0_404, %c0_405] : memref<256x8x128xf32, #tpu.memory_space<vmem>>, vector<1x8x128xf32>
    %744 = vector.shape_cast %743 : vector<1x8x128xf32> to vector<8x128xf32>
    %745 = arith.mulf %628, %744 : vector<8x128xf32>
    %746 = arith.addf %742, %745 : vector<8x128xf32>
    %c205 = arith.constant 205 : index
    %c0_406 = arith.constant 0 : index
    %c0_407 = arith.constant 0 : index
    %747 = vector.load %arg2[%c205, %c0_406, %c0_407] : memref<256x8x128xf32, #tpu.memory_space<vmem>>, vector<1x8x128xf32>
    %748 = vector.shape_cast %747 : vector<1x8x128xf32> to vector<8x128xf32>
    %749 = arith.mulf %660, %748 : vector<8x128xf32>
    %750 = arith.addf %746, %749 : vector<8x128xf32>
    %c206 = arith.constant 206 : index
    %c0_408 = arith.constant 0 : index
    %c0_409 = arith.constant 0 : index
    %751 = vector.load %arg2[%c206, %c0_408, %c0_409] : memref<256x8x128xf32, #tpu.memory_space<vmem>>, vector<1x8x128xf32>
    %752 = vector.shape_cast %751 : vector<1x8x128xf32> to vector<8x128xf32>
    %753 = arith.mulf %692, %752 : vector<8x128xf32>
    %754 = arith.addf %750, %753 : vector<8x128xf32>
    %cst_410 = arith.constant 0.000000e+00 : f32
    %755 = vector.broadcast %cst_410 : f32 to vector<8x128xf32>
    %756 = arith.maximumf %754, %755 : vector<8x128xf32>
    %757 = arith.subf %756, %724 : vector<8x128xf32>
    %758 = math.absf %757 : vector<8x128xf32>
    %cst_411 = arith.constant 0.000000e+00 : f32
    %759 = vector.broadcast %cst_411 : f32 to vector<8x128xf32>
    %760 = arith.subf %759, %758 : vector<8x128xf32>
    %761 = math.exp %760 : vector<8x128xf32>
    %cst_412 = arith.constant 1.000000e+00 : f32
    %762 = vector.broadcast %cst_412 : f32 to vector<8x128xf32>
    %763 = arith.addf %762, %761 : vector<8x128xf32>
    %764 = tpu.reciprocal %763 : vector<8x128xf32> -> vector<8x128xf32>
    %cst_413 = arith.constant 0.000000e+00 : f32
    %765 = vector.broadcast %cst_413 : f32 to vector<8x128xf32>
    %766 = arith.cmpf oge, %757, %765 : vector<8x128xf32>
    %767 = arith.mulf %761, %764 : vector<8x128xf32>
    %768 = arith.select %766, %764, %767 : vector<8x128xi1>, vector<8x128xf32>
    %cst_414 = arith.constant 1.000000e+00 : f32
    %769 = vector.broadcast %cst_414 : f32 to vector<8x128xf32>
    %770 = arith.subf %769, %768 : vector<8x128xf32>
    %c0_415 = arith.constant 0 : index
    %771 = arith.index_cast %c0_i32 : i32 to index
    %c0_416 = arith.constant 0 : index
    %c0_417 = arith.constant 0 : index
    %772 = vector.load %arg3[%c0_415, %771, %c0_416, %c0_417] : memref<2x1x8x128xf32, #tpu.memory_space<vmem>>, vector<1x1x8x128xf32>
    %773 = vector.shape_cast %772 : vector<1x1x8x128xf32> to vector<8x128xf32>
    %774 = vector.shape_cast %770 : vector<8x128xf32> to vector<1x1x8x128xf32>
    tpu.vector_store %arg3[%c0_415, %771, %c0_416, %c0_417], %774 {strides = array<i32>} : memref<2x1x8x128xf32, #tpu.memory_space<vmem>>, vector<1x1x8x128xf32>,
    %c1_418 = arith.constant 1 : index
    %775 = arith.index_cast %c0_i32 : i32 to index
    %c0_419 = arith.constant 0 : index
    %c0_420 = arith.constant 0 : index
    %776 = vector.load %arg3[%c1_418, %775, %c0_419, %c0_420] : memref<2x1x8x128xf32, #tpu.memory_space<vmem>>, vector<1x1x8x128xf32>
    %777 = vector.shape_cast %776 : vector<1x1x8x128xf32> to vector<8x128xf32>
    %778 = vector.shape_cast %768 : vector<8x128xf32> to vector<1x1x8x128xf32>
    tpu.vector_store %arg3[%c1_418, %775, %c0_419, %c0_420], %778 {strides = array<i32>} : memref<2x1x8x128xf32, #tpu.memory_space<vmem>>, vector<1x1x8x128xf32>,
    %c1_i32 = arith.constant 1 : i32
    return
  }
  func.func @transform_0(%arg0: i32) -> (i32, i32, i32, i32) {
    %c0_i32 = arith.constant 0 : i32
    %c0_i32_0 = arith.constant 0 : i32
    %c0_i32_1 = arith.constant 0 : i32
    %c0_i32_2 = arith.constant 0 : i32
    return %c0_i32, %arg0, %c0_i32_0, %c0_i32_1 : i32, i32, i32, i32
  }
  func.func @transform_1(%arg0: i32) -> (i32, i32, i32) {
    %c0_i32 = arith.constant 0 : i32
    %c0_i32_0 = arith.constant 0 : i32
    %c0_i32_1 = arith.constant 0 : i32
    %c0_i32_2 = arith.constant 0 : i32
    return %c0_i32, %c0_i32_0, %c0_i32_1 : i32, i32, i32
  }
  func.func @transform_2(%arg0: i32) -> (i32, i32, i32, i32) {
    %c0_i32 = arith.constant 0 : i32
    %c0_i32_0 = arith.constant 0 : i32
    %c0_i32_1 = arith.constant 0 : i32
    %c0_i32_2 = arith.constant 0 : i32
    return %c0_i32, %arg0, %c0_i32_0, %c0_i32_1 : i32, i32, i32, i32
  }
}

</mosaic_0001>

<llo_original>
// kernel: _rnn_forward.1
$region0: #{_rnn_forward.1}
  #allocation0 [shape = 'u32[]', space=smem, size = 0x4, offset = 0x4, fixed_abs, tag = 'smem constant byte address 0x4 - core index']
  #allocation1 [shape = 'u32[72,128]{1,0:T(1,128)}', space=vmem, size = 0x9000, scoped, tag = 'internal scratch']
  %s0 = inlined_call_operand.vmem [shape: f32[7,1,8,128], index: 0, kind: input, shape index: {}]
  %s1 = inlined_call_operand.vmem [shape: f32[256,8,128], index: 1, kind: input, shape index: {}]
  %s2 = inlined_call_operand.vmem [shape: f32[2,1,8,128], index: 2, kind: output, shape index: {}]
  %s3 = sld [smem:[#allocation0]]
  $region18: #{_rnn_forward.1} parent=0
    _
  %s5 = ssub.s32 1, %s3
  %s6 = scalar_select 0, %s5, %s3
  // Predicated region
  $region2: #{_rnn_forward.1} parent=0 // pred_check
    _
  $region3: #{_rnn_forward.1} parent=0 // pred_check_branch
    %8 = sbr.rel (0) target = $region5
  $region4: #{_rnn_forward.1} parent=0 // pred_region
    _
  $region5: #{_rnn_forward.1} parent=0 // pred_fallthru
    _
  // Predicated region
  $region6: #{_rnn_forward.1} parent=0 // pred_check
    _
  $region7: #{_rnn_forward.1} parent=0 // pred_check_branch
    %10 = sbr.rel (0) target = $region9
  $region8: #{_rnn_forward.1} parent=0 // pred_region
    _
  $region9: #{_rnn_forward.1} parent=0 // pred_fallthru
    _
  %v11 = vld [vmem:[%s0] sm:$0xff]
  %s12 = scalar_lea.vmem %s0, 8
  %v13 = vld [vmem:[%s12] sm:$0xff]
  %s14 = scalar_lea.vmem %s0, 16
  %v15 = vld [vmem:[%s14] sm:$0xff]
  %s16 = scalar_lea.vmem %s0, 24
  %v17 = vld [vmem:[%s16] sm:$0xff]
  %s18 = scalar_lea.vmem %s0, 32
  %v19 = vld [vmem:[%s18] sm:$0xff]
  %s20 = scalar_lea.vmem %s0, 40
  %v21 = vld [vmem:[%s20] sm:$0xff]
  %s22 = scalar_lea.vmem %s0, 48
  %v23 = vld [vmem:[%s22] sm:$0xff]
  %s24 = scalar_lea.vmem %s1, 56
  %v25 = vld [vmem:[%s24] sm:$0xff]
  %v26 = vld [vmem:[%s1] sm:$0xff]
  %v27 = vmul.f32 %v11, %v26
  %v28 = vadd.f32 %v25, %v27
  %s29 = scalar_lea.vmem %s1, 8
  %v30 = vld [vmem:[%s29] sm:$0xff]
  %v31 = vmul.f32 %v13, %v30
  %v32 = vadd.f32 %v28, %v31
  %s33 = scalar_lea.vmem %s1, 16
  %v34 = vld [vmem:[%s33] sm:$0xff]
  %v35 = vmul.f32 %v15, %v34
  %v36 = vadd.f32 %v32, %v35
  %s37 = scalar_lea.vmem %s1, 24
  %v38 = vld [vmem:[%s37] sm:$0xff]
  %v39 = vmul.f32 %v17, %v38
  %v40 = vadd.f32 %v36, %v39
  %s41 = scalar_lea.vmem %s1, 32
  %v42 = vld [vmem:[%s41] sm:$0xff]
  %v43 = vmul.f32 %v19, %v42
  %v44 = vadd.f32 %v40, %v43
  %s45 = scalar_lea.vmem %s1, 40
  %v46 = vld [vmem:[%s45] sm:$0xff]
  %v47 = vmul.f32 %v21, %v46
  %v48 = vadd.f32 %v44, %v47
  %s49 = scalar_lea.vmem %s1, 48
  %v50 = vld [vmem:[%s49] sm:$0xff]
  %v51 = vmul.f32 %v23, %v50
  %v52 = vadd.f32 %v48, %v51
  %v53 = vmax.f32 %v52, 0.0
  %s54 = scalar_lea.vmem %s1, 120
  %v55 = vld [vmem:[%s54] sm:$0xff]
  %s56 = scalar_lea.vmem %s1, 64
  %v57 = vld [vmem:[%s56] sm:$0xff]
  %v58 = vmul.f32 %v11, %v57
  %v59 = vadd.f32 %v55, %v58
  %s60 = scalar_lea.vmem %s1, 72
  %v61 = vld [vmem:[%s60] sm:$0xff]
  %v62 = vmul.f32 %v13, %v61
  %v63 = vadd.f32 %v59, %v62
  %s64 = scalar_lea.vmem %s1, 80
  %v65 = vld [vmem:[%s64] sm:$0xff]
  %v66 = vmul.f32 %v15, %v65
  %v67 = vadd.f32 %v63, %v66
  %s68 = scalar_lea.vmem %s1, 88
  %v69 = vld [vmem:[%s68] sm:$0xff]
  %v70 = vmul.f32 %v17, %v69
  %v71 = vadd.f32 %v67, %v70
  %s72 = scalar_lea.vmem %s1, 96
  %v73 = vld [vmem:[%s72] sm:$0xff]
  %v74 = vmul.f32 %v19, %v73
  %v75 = vadd.f32 %v71, %v74
  %s76 = scalar_lea.vmem %s1, 104
  %v77 = vld [vmem:[%s76] sm:$0xff]
  %v78 = vmul.f32 %v21, %v77
  %v79 = vadd.f32 %v75, %v78
  %s80 = scalar_lea.vmem %s1, 112
  %v81 = vld [vmem:[%s80] sm:$0xff]
  %v82 = vmul.f32 %v23, %v81
  %v83 = vadd.f32 %v79, %v82
  %v84 = vmax.f32 %v83, 0.0
  %s85 = scalar_lea.vmem %s1, 184
  %v86 = vld [vmem:[%s85] sm:$0xff]
  %s87 = scalar_lea.vmem %s1, 128
  %v88 = vld [vmem:[%s87] sm:$0xff]
  %v89 = vmul.f32 %v11, %v88
  %v90 = vadd.f32 %v86, %v89
  %s91 = scalar_lea.vmem %s1, 136
  %v92 = vld [vmem:[%s91] sm:$0xff]
  %v93 = vmul.f32 %v13, %v92
  %v94 = vadd.f32 %v90, %v93
  %s95 = scalar_lea.vmem %s1, 144
  %v96 = vld [vmem:[%s95] sm:$0xff]
  %v97 = vmul.f32 %v15, %v96
  %v98 = vadd.f32 %v94, %v97
  %s99 = scalar_lea.vmem %s1, 152
  %v100 = vld [vmem:[%s99] sm:$0xff]
  %v101 = vmul.f32 %v17, %v100
  %v102 = vadd.f32 %v98, %v101
  %s103 = scalar_lea.vmem %s1, 160
  %v104 = vld [vmem:[%s103] sm:$0xff]
  %v105 = vmul.f32 %v19, %v104
  %v106 = vadd.f32 %v102, %v105
  %s107 = scalar_lea.vmem %s1, 168
  %v108 = vld [vmem:[%s107] sm:$0xff]
  %v109 = vmul.f32 %v21, %v108
  %v110 = vadd.f32 %v106, %v109
  %s111 = scalar_lea.vmem %s1, 176
  %v112 = vld [vmem:[%s111] sm:$0xff]
  %v113 = vmul.f32 %v23, %v112
  %v114 = vadd.f32 %v110, %v113
  %v115 = vmax.f32 %v114, 0.0
  %s116 = scalar_lea.vmem %s1, 248
  %v117 = vld [vmem:[%s116] sm:$0xff]
  %s118 = scalar_lea.vmem %s1, 192
  %v119 = vld [vmem:[%s118] sm:$0xff]
  %v120 = vmul.f32 %v11, %v119
  %v121 = vadd.f32 %v117, %v120
  %s122 = scalar_lea.vmem %s1, 200
  %v123 = vld [vmem:[%s122] sm:$0xff]
  %v124 = vmul.f32 %v13, %v123
  %v125 = vadd.f32 %v121, %v124
  %s126 = scalar_lea.vmem %s1, 208
  %v127 = vld [vmem:[%s126] sm:$0xff]
  %v128 = vmul.f32 %v15, %v127
  %v129 = vadd.f32 %v125, %v128
  %s130 = scalar_lea.vmem %s1, 216
  %v131 = vld [vmem:[%s130] sm:$0xff]
  %v132 = vmul.f32 %v17, %v131
  %v133 = vadd.f32 %v129, %v132
  %s134 = scalar_lea.vmem %s1, 224
  %v135 = vld [vmem:[%s134] sm:$0xff]
  %v136 = vmul.f32 %v19, %v135
  %v137 = vadd.f32 %v133, %v136
  %s138 = scalar_lea.vmem %s1, 232
  %v139 = vld [vmem:[%s138] sm:$0xff]
  %v140 = vmul.f32 %v21, %v139
  %v141 = vadd.f32 %v137, %v140
  %s142 = scalar_lea.vmem %s1, 240
  %v143 = vld [vmem:[%s142] sm:$0xff]
  %v144 = vmul.f32 %v23, %v143
  %v145 = vadd.f32 %v141, %v144
  %v146 = vmax.f32 %v145, 0.0
  %s147 = scalar_lea.vmem %s1, 312
  %v148 = vld [vmem:[%s147] sm:$0xff]
  %s149 = scalar_lea.vmem %s1, 256
  %v150 = vld [vmem:[%s149] sm:$0xff]
  %v151 = vmul.f32 %v11, %v150
  %v152 = vadd.f32 %v148, %v151
  %s153 = scalar_lea.vmem %s1, 264
  %v154 = vld [vmem:[%s153] sm:$0xff]
  %v155 = vmul.f32 %v13, %v154
  %v156 = vadd.f32 %v152, %v155
  %s157 = scalar_lea.vmem %s1, 272
  %v158 = vld [vmem:[%s157] sm:$0xff]
  %v159 = vmul.f32 %v15, %v158
  %v160 = vadd.f32 %v156, %v159
  %s161 = scalar_lea.vmem %s1, 280
  %v162 = vld [vmem:[%s161] sm:$0xff]
  %v163 = vmul.f32 %v17, %v162
  %v164 = vadd.f32 %v160, %v163
  %s165 = scalar_lea.vmem %s1, 288
  %v166 = vld [vmem:[%s165] sm:$0xff]
  %v167 = vmul.f32 %v19, %v166
  %v168 = vadd.f32 %v164, %v167
  %s169 = scalar_lea.vmem %s1, 296
  %v170 = vld [vmem:[%s169] sm:$0xff]
  %v171 = vmul.f32 %v21, %v170
  %v172 = vadd.f32 %v168, %v171
  %s173 = scalar_lea.vmem %s1, 304
  %v174 = vld [vmem:[%s173] sm:$0xff]
  %v175 = vmul.f32 %v23, %v174
  %v176 = vadd.f32 %v172, %v175
  %v177 = vmax.f32 %v176, 0.0
  %s178 = scalar_lea.vmem %s1, 376
  %v179 = vld [vmem:[%s178] sm:$0xff]
  %s180 = scalar_lea.vmem %s1, 320
  %v181 = vld [vmem:[%s180] sm:$0xff]
  %v182 = vmul.f32 %v11, %v181
  %v183 = vadd.f32 %v179, %v182
  %s184 = scalar_lea.vmem %s1, 328
  %v185 = vld [vmem:[%s184] sm:$0xff]
  %v186 = vmul.f32 %v13, %v185
  %v187 = vadd.f32 %v183, %v186
  %s188 = scalar_lea.vmem %s1, 336
  %v189 = vld [vmem:[%s188] sm:$0xff]
  %v190 = vmul.f32 %v15, %v189
  %v191 = vadd.f32 %v187, %v190
  %s192 = scalar_lea.vmem %s1, 344
  %v193 = vld [vmem:[%s192] sm:$0xff]
  %v194 = vmul.f32 %v17, %v193
  %v195 = vadd.f32 %v191, %v194
  %s196 = scalar_lea.vmem %s1, 352
  %v197 = vld [vmem:[%s196] sm:$0xff]
  %v198 = vmul.f32 %v19, %v197
  %v199 = vadd.f32 %v195, %v198
  %s200 = scalar_lea.vmem %s1, 360
  %v201 = vld [vmem:[%s200] sm:$0xff]
  %v202 = vmul.f32 %v21, %v201
  %v203 = vadd.f32 %v199, %v202
  %s204 = scalar_lea.vmem %s1, 368
  %v205 = vld [vmem:[%s204] sm:$0xff]
  %v206 = vmul.f32 %v23, %v205
  %v207 = vadd.f32 %v203, %v206
  %v208 = vmax.f32 %v207, 0.0
  %s209 = scalar_lea.vmem %s1, 440
  %v210 = vld [vmem:[%s209] sm:$0xff]
  %s211 = scalar_lea.vmem %s1, 384
  %v212 = vld [vmem:[%s211] sm:$0xff]
  %v213 = vmul.f32 %v11, %v212
  %v214 = vadd.f32 %v210, %v213
  %s215 = scalar_lea.vmem %s1, 392
  %v216 = vld [vmem:[%s215] sm:$0xff]
  %v217 = vmul.f32 %v13, %v216
  %v218 = vadd.f32 %v214, %v217
  %s219 = scalar_lea.vmem %s1, 400
  %v220 = vld [vmem:[%s219] sm:$0xff]
  %v221 = vmul.f32 %v15, %v220
  %v222 = vadd.f32 %v218, %v221
  %s223 = scalar_lea.vmem %s1, 408
  %v224 = vld [vmem:[%s223] sm:$0xff]
  %v225 = vmul.f32 %v17, %v224
  %v226 = vadd.f32 %v222, %v225
  %s227 = scalar_lea.vmem %s1, 416
  %v228 = vld [vmem:[%s227] sm:$0xff]
  %v229 = vmul.f32 %v19, %v228
  %v230 = vadd.f32 %v226, %v229
  %s231 = scalar_lea.vmem %s1, 424
  %v232 = vld [vmem:[%s231] sm:$0xff]
  %v233 = vmul.f32 %v21, %v232
  %v234 = vadd.f32 %v230, %v233
  %s235 = scalar_lea.vmem %s1, 432
  %v236 = vld [vmem:[%s235] sm:$0xff]
  %v237 = vmul.f32 %v23, %v236
  %v238 = vadd.f32 %v234, %v237
  %v239 = vmax.f32 %v238, 0.0
  %s240 = scalar_lea.vmem %s1, 568
  %v241 = vld [vmem:[%s240] sm:$0xff]
  %s242 = scalar_lea.vmem %s1, 512
  %v243 = vld [vmem:[%s242] sm:$0xff]
  %v244 = vmul.f32 %v53, %v243
  %v245 = vadd.f32 %v241, %v244
  %s246 = scalar_lea.vmem %s1, 520
  %v247 = vld [vmem:[%s246] sm:$0xff]
  %v248 = vmul.f32 %v84, %v247
  %v249 = vadd.f32 %v245, %v248
  %s250 = scalar_lea.vmem %s1, 528
  %v251 = vld [vmem:[%s250] sm:$0xff]
  %v252 = vmul.f32 %v115, %v251
  %v253 = vadd.f32 %v249, %v252
  %s254 = scalar_lea.vmem %s1, 536
  %v255 = vld [vmem:[%s254] sm:$0xff]
  %v256 = vmul.f32 %v146, %v255
  %v257 = vadd.f32 %v253, %v256
  %s258 = scalar_lea.vmem %s1, 544
  %v259 = vld [vmem:[%s258] sm:$0xff]
  %v260 = vmul.f32 %v177, %v259
  %v261 = vadd.f32 %v257, %v260
  %s262 = scalar_lea.vmem %s1, 552
  %v263 = vld [vmem:[%s262] sm:$0xff]
  %v264 = vmul.f32 %v208, %v263
  %v265 = vadd.f32 %v261, %v264
  %s266 = scalar_lea.vmem %s1, 560
  %v267 = vld [vmem:[%s266] sm:$0xff]
  %v268 = vmul.f32 %v239, %v267
  %v269 = vadd.f32 %v265, %v268
  %v270 = vmax.f32 %v269, 0.0
  %s271 = scalar_lea.vmem %s1, 632
  %v272 = vld [vmem:[%s271] sm:$0xff]
  %s273 = scalar_lea.vmem %s1, 576
  %v274 = vld [vmem:[%s273] sm:$0xff]
  %v275 = vmul.f32 %v53, %v274
  %v276 = vadd.f32 %v272, %v275
  %s277 = scalar_lea.vmem %s1, 584
  %v278 = vld [vmem:[%s277] sm:$0xff]
  %v279 = vmul.f32 %v84, %v278
  %v280 = vadd.f32 %v276, %v279
  %s281 = scalar_lea.vmem %s1, 592
  %v282 = vld [vmem:[%s281] sm:$0xff]
  %v283 = vmul.f32 %v115, %v282
  %v284 = vadd.f32 %v280, %v283
  %s285 = scalar_lea.vmem %s1, 600
  %v286 = vld [vmem:[%s285] sm:$0xff]
  %v287 = vmul.f32 %v146, %v286
  %v288 = vadd.f32 %v284, %v287
  %s289 = scalar_lea.vmem %s1, 608
  %v290 = vld [vmem:[%s289] sm:$0xff]
  %v291 = vmul.f32 %v177, %v290
  %v292 = vadd.f32 %v288, %v291
  %s293 = scalar_lea.vmem %s1, 616
  %v294 = vld [vmem:[%s293] sm:$0xff]
  %v295 = vmul.f32 %v208, %v294
  %v296 = vadd.f32 %v292, %v295
  %s297 = scalar_lea.vmem %s1, 624
  %v298 = vld [vmem:[%s297] sm:$0xff]
  %v299 = vmul.f32 %v239, %v298
  %v300 = vadd.f32 %v296, %v299
  %v301 = vmax.f32 %v300, 0.0
  %s302 = scalar_lea.vmem %s1, 696
  %v303 = vld [vmem:[%s302] sm:$0xff]
  %s304 = scalar_lea.vmem %s1, 640
  %v305 = vld [vmem:[%s304] sm:$0xff]
  %v306 = vmul.f32 %v53, %v305
  %v307 = vadd.f32 %v303, %v306
  %s308 = scalar_lea.vmem %s1, 648
  %v309 = vld [vmem:[%s308] sm:$0xff]
  %v310 = vmul.f32 %v84, %v309
  %v311 = vadd.f32 %v307, %v310
  %s312 = scalar_lea.vmem %s1, 656
  %v313 = vld [vmem:[%s312] sm:$0xff]
  %v314 = vmul.f32 %v115, %v313
  %v315 = vadd.f32 %v311, %v314
  %s316 = scalar_lea.vmem %s1, 664
  %v317 = vld [vmem:[%s316] sm:$0xff]
  %v318 = vmul.f32 %v146, %v317
  %v319 = vadd.f32 %v315, %v318
  %s320 = scalar_lea.vmem %s1, 672
  %v321 = vld [vmem:[%s320] sm:$0xff]
  %v322 = vmul.f32 %v177, %v321
  %v323 = vadd.f32 %v319, %v322
  %s324 = scalar_lea.vmem %s1, 680
  %v325 = vld [vmem:[%s324] sm:$0xff]
  %v326 = vmul.f32 %v208, %v325
  %v327 = vadd.f32 %v323, %v326
  %s328 = scalar_lea.vmem %s1, 688
  %v329 = vld [vmem:[%s328] sm:$0xff]
  %v330 = vmul.f32 %v239, %v329
  %v331 = vadd.f32 %v327, %v330
  %v332 = vmax.f32 %v331, 0.0
  %s333 = scalar_lea.vmem %s1, 760
  %v334 = vld [vmem:[%s333] sm:$0xff]
  %s335 = scalar_lea.vmem %s1, 704
  %v336 = vld [vmem:[%s335] sm:$0xff]
  %v337 = vmul.f32 %v53, %v336
  %v338 = vadd.f32 %v334, %v337
  %s339 = scalar_lea.vmem %s1, 712
  %v340 = vld [vmem:[%s339] sm:$0xff]
  %v341 = vmul.f32 %v84, %v340
  %v342 = vadd.f32 %v338, %v341
  %s343 = scalar_lea.vmem %s1, 720
  %v344 = vld [vmem:[%s343] sm:$0xff]
  %v345 = vmul.f32 %v115, %v344
  %v346 = vadd.f32 %v342, %v345
  %s347 = scalar_lea.vmem %s1, 728
  %v348 = vld [vmem:[%s347] sm:$0xff]
  %v349 = vmul.f32 %v146, %v348
  %v350 = vadd.f32 %v346, %v349
  %s351 = scalar_lea.vmem %s1, 736
  %v352 = vld [vmem:[%s351] sm:$0xff]
  %v353 = vmul.f32 %v177, %v352
  %v354 = vadd.f32 %v350, %v353
  %s355 = scalar_lea.vmem %s1, 744
  %v356 = vld [vmem:[%s355] sm:$0xff]
  %v357 = vmul.f32 %v208, %v356
  %v358 = vadd.f32 %v354, %v357
  %s359 = scalar_lea.vmem %s1, 752
  %v360 = vld [vmem:[%s359] sm:$0xff]
  %v361 = vmul.f32 %v239, %v360
  %v362 = vadd.f32 %v358, %v361
  %v363 = vmax.f32 %v362, 0.0
  %s364 = scalar_lea.vmem %s1, 824
  %v365 = vld [vmem:[%s364] sm:$0xff]
  %s366 = scalar_lea.vmem %s1, 768
  %v367 = vld [vmem:[%s366] sm:$0xff]
  %v368 = vmul.f32 %v53, %v367
  %v369 = vadd.f32 %v365, %v368
  %s370 = scalar_lea.vmem %s1, 776
  %v371 = vld [vmem:[%s370] sm:$0xff]
  %v372 = vmul.f32 %v84, %v371
  %v373 = vadd.f32 %v369, %v372
  %s374 = scalar_lea.vmem %s1, 784
  %v375 = vld [vmem:[%s374] sm:$0xff]
  %v376 = vmul.f32 %v115, %v375
  %v377 = vadd.f32 %v373, %v376
  %s378 = scalar_lea.vmem %s1, 792
  %v379 = vld [vmem:[%s378] sm:$0xff]
  %v380 = vmul.f32 %v146, %v379
  %v381 = vadd.f32 %v377, %v380
  %s382 = scalar_lea.vmem %s1, 800
  %v383 = vld [vmem:[%s382] sm:$0xff]
  %v384 = vmul.f32 %v177, %v383
  %v385 = vadd.f32 %v381, %v384
  %s386 = scalar_lea.vmem %s1, 808
  %v387 = vld [vmem:[%s386] sm:$0xff]
  %v388 = vmul.f32 %v208, %v387
  %v389 = vadd.f32 %v385, %v388
  %s390 = scalar_lea.vmem %s1, 816
  %v391 = vld [vmem:[%s390] sm:$0xff]
  %v392 = vmul.f32 %v239, %v391
  %v393 = vadd.f32 %v389, %v392
  %v394 = vmax.f32 %v393, 0.0
  %s395 = scalar_lea.vmem %s1, 888
  %v396 = vld [vmem:[%s395] sm:$0xff]
  %s397 = scalar_lea.vmem %s1, 832
  %v398 = vld [vmem:[%s397] sm:$0xff]
  %v399 = vmul.f32 %v53, %v398
  %v400 = vadd.f32 %v396, %v399
  %s401 = scalar_lea.vmem %s1, 840
  %v402 = vld [vmem:[%s401] sm:$0xff]
  %v403 = vmul.f32 %v84, %v402
  %v404 = vadd.f32 %v400, %v403
  %s405 = scalar_lea.vmem %s1, 848
  %v406 = vld [vmem:[%s405] sm:$0xff]
  %v407 = vmul.f32 %v115, %v406
  %v408 = vadd.f32 %v404, %v407
  %s409 = scalar_lea.vmem %s1, 856
  %v410 = vld [vmem:[%s409] sm:$0xff]
  %v411 = vmul.f32 %v146, %v410
  %v412 = vadd.f32 %v408, %v411
  %s413 = scalar_lea.vmem %s1, 864
  %v414 = vld [vmem:[%s413] sm:$0xff]
  %v415 = vmul.f32 %v177, %v414
  %v416 = vadd.f32 %v412, %v415
  %s417 = scalar_lea.vmem %s1, 872
  %v418 = vld [vmem:[%s417] sm:$0xff]
  %v419 = vmul.f32 %v208, %v418
  %v420 = vadd.f32 %v416, %v419
  %s421 = scalar_lea.vmem %s1, 880
  %v422 = vld [vmem:[%s421] sm:$0xff]
  %v423 = vmul.f32 %v239, %v422
  %v424 = vadd.f32 %v420, %v423
  %v425 = vmax.f32 %v424, 0.0
  %s426 = scalar_lea.vmem %s1, 952
  %v427 = vld [vmem:[%s426] sm:$0xff]
  %s428 = scalar_lea.vmem %s1, 896
  %v429 = vld [vmem:[%s428] sm:$0xff]
  %v430 = vmul.f32 %v53, %v429
  %v431 = vadd.f32 %v427, %v430
  %s432 = scalar_lea.vmem %s1, 904
  %v433 = vld [vmem:[%s432] sm:$0xff]
  %v434 = vmul.f32 %v84, %v433
  %v435 = vadd.f32 %v431, %v434
  %s436 = scalar_lea.vmem %s1, 912
  %v437 = vld [vmem:[%s436] sm:$0xff]
  %v438 = vmul.f32 %v115, %v437
  %v439 = vadd.f32 %v435, %v438
  %s440 = scalar_lea.vmem %s1, 920
  %v441 = vld [vmem:[%s440] sm:$0xff]
  %v442 = vmul.f32 %v146, %v441
  %v443 = vadd.f32 %v439, %v442
  %s444 = scalar_lea.vmem %s1, 928
  %v445 = vld [vmem:[%s444] sm:$0xff]
  %v446 = vmul.f32 %v177, %v445
  %v447 = vadd.f32 %v443, %v446
  %s448 = scalar_lea.vmem %s1, 936
  %v449 = vld [vmem:[%s448] sm:$0xff]
  %v450 = vmul.f32 %v208, %v449
  %v451 = vadd.f32 %v447, %v450
  %s452 = scalar_lea.vmem %s1, 944
  %v453 = vld [vmem:[%s452] sm:$0xff]
  %v454 = vmul.f32 %v239, %v453
  %v455 = vadd.f32 %v451, %v454
  %v456 = vmax.f32 %v455, 0.0
  %s457 = scalar_lea.vmem %s1, 1080
  %v458 = vld [vmem:[%s457] sm:$0xff]
  %s459 = scalar_lea.vmem %s1, 1024
  %v460 = vld [vmem:[%s459] sm:$0xff]
  %v461 = vmul.f32 %v270, %v460
  %v462 = vadd.f32 %v458, %v461
  %s463 = scalar_lea.vmem %s1, 1032
  %v464 = vld [vmem:[%s463] sm:$0xff]
  %v465 = vmul.f32 %v301, %v464
  %v466 = vadd.f32 %v462, %v465
  %s467 = scalar_lea.vmem %s1, 1040
  %v468 = vld [vmem:[%s467] sm:$0xff]
  %v469 = vmul.f32 %v332, %v468
  %v470 = vadd.f32 %v466, %v469
  %s471 = scalar_lea.vmem %s1, 1048
  %v472 = vld [vmem:[%s471] sm:$0xff]
  %v473 = vmul.f32 %v363, %v472
  %v474 = vadd.f32 %v470, %v473
  %s475 = scalar_lea.vmem %s1, 1056
  %v476 = vld [vmem:[%s475] sm:$0xff]
  %v477 = vmul.f32 %v394, %v476
  %v478 = vadd.f32 %v474, %v477
  %s479 = scalar_lea.vmem %s1, 1064
  %v480 = vld [vmem:[%s479] sm:$0xff]
  %v481 = vmul.f32 %v425, %v480
  %v482 = vadd.f32 %v478, %v481
  %s483 = scalar_lea.vmem %s1, 1072
  %v484 = vld [vmem:[%s483] sm:$0xff]
  %v485 = vmul.f32 %v456, %v484
  %v486 = vadd.f32 %v482, %v485
  %v487 = vmax.f32 %v486, 0.0
  %s488 = scalar_lea.vmem %s1, 1144
  %v489 = vld [vmem:[%s488] sm:$0xff]
  %s490 = scalar_lea.vmem %s1, 1088
  %v491 = vld [vmem:[%s490] sm:$0xff]
  %v492 = vmul.f32 %v270, %v491
  %v493 = vadd.f32 %v489, %v492
  %s494 = scalar_lea.vmem %s1, 1096
  %v495 = vld [vmem:[%s494] sm:$0xff]
  %v496 = vmul.f32 %v301, %v495
  %v497 = vadd.f32 %v493, %v496
  %s498 = scalar_lea.vmem %s1, 1104
  %v499 = vld [vmem:[%s498] sm:$0xff]
  %v500 = vmul.f32 %v332, %v499
  %v501 = vadd.f32 %v497, %v500
  %s502 = scalar_lea.vmem %s1, 1112
  %v503 = vld [vmem:[%s502] sm:$0xff]
  %v504 = vmul.f32 %v363, %v503
  %v505 = vadd.f32 %v501, %v504
  %s506 = scalar_lea.vmem %s1, 1120
  %v507 = vld [vmem:[%s506] sm:$0xff]
  %v508 = vmul.f32 %v394, %v507
  %v509 = vadd.f32 %v505, %v508
  %s510 = scalar_lea.vmem %s1, 1128
  %v511 = vld [vmem:[%s510] sm:$0xff]
  %v512 = vmul.f32 %v425, %v511
  %v513 = vadd.f32 %v509, %v512
  %s514 = scalar_lea.vmem %s1, 1136
  %v515 = vld [vmem:[%s514] sm:$0xff]
  %v516 = vmul.f32 %v456, %v515
  %v517 = vadd.f32 %v513, %v516
  %v518 = vmax.f32 %v517, 0.0
  %s519 = scalar_lea.vmem %s1, 1208
  %v520 = vld [vmem:[%s519] sm:$0xff]
  %s521 = scalar_lea.vmem %s1, 1152
  %v522 = vld [vmem:[%s521] sm:$0xff]
  %v523 = vmul.f32 %v270, %v522
  %v524 = vadd.f32 %v520, %v523
  %s525 = scalar_lea.vmem %s1, 1160
  %v526 = vld [vmem:[%s525] sm:$0xff]
  %v527 = vmul.f32 %v301, %v526
  %v528 = vadd.f32 %v524, %v527
  %s529 = scalar_lea.vmem %s1, 1168
  %v530 = vld [vmem:[%s529] sm:$0xff]
  %v531 = vmul.f32 %v332, %v530
  %v532 = vadd.f32 %v528, %v531
  %s533 = scalar_lea.vmem %s1, 1176
  %v534 = vld [vmem:[%s533] sm:$0xff]
  %v535 = vmul.f32 %v363, %v534
  %v536 = vadd.f32 %v532, %v535
  %s537 = scalar_lea.vmem %s1, 1184
  %v538 = vld [vmem:[%s537] sm:$0xff]
  %v539 = vmul.f32 %v394, %v538
  %v540 = vadd.f32 %v536, %v539
  %s541 = scalar_lea.vmem %s1, 1192
  %v542 = vld [vmem:[%s541] sm:$0xff]
  %v543 = vmul.f32 %v425, %v542
  %v544 = vadd.f32 %v540, %v543
  %s545 = scalar_lea.vmem %s1, 1200
  %v546 = vld [vmem:[%s545] sm:$0xff]
  %v547 = vmul.f32 %v456, %v546
  %v548 = vadd.f32 %v544, %v547
  %v549 = vmax.f32 %v548, 0.0
  %s550 = scalar_lea.vmem %s1, 1272
  %v551 = vld [vmem:[%s550] sm:$0xff]
  %s552 = scalar_lea.vmem %s1, 1216
  %v553 = vld [vmem:[%s552] sm:$0xff]
  %v554 = vmul.f32 %v270, %v553
  %v555 = vadd.f32 %v551, %v554
  %s556 = scalar_lea.vmem %s1, 1224
  %v557 = vld [vmem:[%s556] sm:$0xff]
  %v558 = vmul.f32 %v301, %v557
  %v559 = vadd.f32 %v555, %v558
  %s560 = scalar_lea.vmem %s1, 1232
  %v561 = vld [vmem:[%s560] sm:$0xff]
  %v562 = vmul.f32 %v332, %v561
  %v563 = vadd.f32 %v559, %v562
  %s564 = scalar_lea.vmem %s1, 1240
  %v565 = vld [vmem:[%s564] sm:$0xff]
  %v566 = vmul.f32 %v363, %v565
  %v567 = vadd.f32 %v563, %v566
  %s568 = scalar_lea.vmem %s1, 1248
  %v569 = vld [vmem:[%s568] sm:$0xff]
  %v570 = vmul.f32 %v394, %v569
  %v571 = vadd.f32 %v567, %v570
  %s572 = scalar_lea.vmem %s1, 1256
  %v573 = vld [vmem:[%s572] sm:$0xff]
  %v574 = vmul.f32 %v425, %v573
  %v575 = vadd.f32 %v571, %v574
  %s576 = scalar_lea.vmem %s1, 1264
  %v577 = vld [vmem:[%s576] sm:$0xff]
  %v578 = vmul.f32 %v456, %v577
  %v579 = vadd.f32 %v575, %v578
  %v580 = vmax.f32 %v579, 0.0
  %s581 = scalar_lea.vmem %s1, 1336
  %v582 = vld [vmem:[%s581] sm:$0xff]
  %s583 = scalar_lea.vmem %s1, 1280
  %v584 = vld [vmem:[%s583] sm:$0xff]
  %v585 = vmul.f32 %v270, %v584
  %v586 = vadd.f32 %v582, %v585
  %s587 = scalar_lea.vmem %s1, 1288
  %v588 = vld [vmem:[%s587] sm:$0xff]
  %v589 = vmul.f32 %v301, %v588
  %v590 = vadd.f32 %v586, %v589
  %s591 = scalar_lea.vmem %s1, 1296
  %v592 = vld [vmem:[%s591] sm:$0xff]
  %v593 = vmul.f32 %v332, %v592
  %v594 = vadd.f32 %v590, %v593
  %s595 = scalar_lea.vmem %s1, 1304
  %v596 = vld [vmem:[%s595] sm:$0xff]
  %v597 = vmul.f32 %v363, %v596
  %v598 = vadd.f32 %v594, %v597
  %s599 = scalar_lea.vmem %s1, 1312
  %v600 = vld [vmem:[%s599] sm:$0xff]
  %v601 = vmul.f32 %v394, %v600
  %v602 = vadd.f32 %v598, %v601
  %s603 = scalar_lea.vmem %s1, 1320
  %v604 = vld [vmem:[%s603] sm:$0xff]
  %v605 = vmul.f32 %v425, %v604
  %v606 = vadd.f32 %v602, %v605
  %s607 = scalar_lea.vmem %s1, 1328
  %v608 = vld [vmem:[%s607] sm:$0xff]
  %v609 = vmul.f32 %v456, %v608
  %v610 = vadd.f32 %v606, %v609
  %v611 = vmax.f32 %v610, 0.0
  %s612 = scalar_lea.vmem %s1, 1400
  %v613 = vld [vmem:[%s612] sm:$0xff]
  %s614 = scalar_lea.vmem %s1, 1344
  %v615 = vld [vmem:[%s614] sm:$0xff]
  %v616 = vmul.f32 %v270, %v615
  %v617 = vadd.f32 %v613, %v616
  %s618 = scalar_lea.vmem %s1, 1352
  %v619 = vld [vmem:[%s618] sm:$0xff]
  %v620 = vmul.f32 %v301, %v619
  %v621 = vadd.f32 %v617, %v620
  %s622 = scalar_lea.vmem %s1, 1360
  %v623 = vld [vmem:[%s622] sm:$0xff]
  %v624 = vmul.f32 %v332, %v623
  %v625 = vadd.f32 %v621, %v624
  %s626 = scalar_lea.vmem %s1, 1368
  %v627 = vld [vmem:[%s626] sm:$0xff]
  %v628 = vmul.f32 %v363, %v627
  %v629 = vadd.f32 %v625, %v628
  %s630 = scalar_lea.vmem %s1, 1376
  %v631 = vld [vmem:[%s630] sm:$0xff]
  %v632 = vmul.f32 %v394, %v631
  %v633 = vadd.f32 %v629, %v632
  %s634 = scalar_lea.vmem %s1, 1384
  %v635 = vld [vmem:[%s634] sm:$0xff]
  %v636 = vmul.f32 %v425, %v635
  %v637 = vadd.f32 %v633, %v636
  %s638 = scalar_lea.vmem %s1, 1392
  %v639 = vld [vmem:[%s638] sm:$0xff]
  %v640 = vmul.f32 %v456, %v639
  %v641 = vadd.f32 %v637, %v640
  %v642 = vmax.f32 %v641, 0.0
  %s643 = scalar_lea.vmem %s1, 1464
  %v644 = vld [vmem:[%s643] sm:$0xff]
  %s645 = scalar_lea.vmem %s1, 1408
  %v646 = vld [vmem:[%s645] sm:$0xff]
  %v647 = vmul.f32 %v270, %v646
  %v648 = vadd.f32 %v644, %v647
  %s649 = scalar_lea.vmem %s1, 1416
  %v650 = vld [vmem:[%s649] sm:$0xff]
  %v651 = vmul.f32 %v301, %v650
  %v652 = vadd.f32 %v648, %v651
  %s653 = scalar_lea.vmem %s1, 1424
  %v654 = vld [vmem:[%s653] sm:$0xff]
  %v655 = vmul.f32 %v332, %v654
  %v656 = vadd.f32 %v652, %v655
  %s657 = scalar_lea.vmem %s1, 1432
  %v658 = vld [vmem:[%s657] sm:$0xff]
  %v659 = vmul.f32 %v363, %v658
  %v660 = vadd.f32 %v656, %v659
  %s661 = scalar_lea.vmem %s1, 1440
  %v662 = vld [vmem:[%s661] sm:$0xff]
  %v663 = vmul.f32 %v394, %v662
  %v664 = vadd.f32 %v660, %v663
  %s665 = scalar_lea.vmem %s1, 1448
  %v666 = vld [vmem:[%s665] sm:$0xff]
  %v667 = vmul.f32 %v425, %v666
  %v668 = vadd.f32 %v664, %v667
  %s669 = scalar_lea.vmem %s1, 1456
  %v670 = vld [vmem:[%s669] sm:$0xff]
  %v671 = vmul.f32 %v456, %v670
  %v672 = vadd.f32 %v668, %v671
  %v673 = vmax.f32 %v672, 0.0
  %s674 = scalar_lea.vmem %s1, 1592
  %v675 = vld [vmem:[%s674] sm:$0xff]
  %s676 = scalar_lea.vmem %s1, 1536
  %v677 = vld [vmem:[%s676] sm:$0xff]
  %v678 = vmul.f32 %v487, %v677
  %v679 = vadd.f32 %v675, %v678
  %s680 = scalar_lea.vmem %s1, 1544
  %v681 = vld [vmem:[%s680] sm:$0xff]
  %v682 = vmul.f32 %v518, %v681
  %v683 = vadd.f32 %v679, %v682
  %s684 = scalar_lea.vmem %s1, 1552
  %v685 = vld [vmem:[%s684] sm:$0xff]
  %v686 = vmul.f32 %v549, %v685
  %v687 = vadd.f32 %v683, %v686
  %s688 = scalar_lea.vmem %s1, 1560
  %v689 = vld [vmem:[%s688] sm:$0xff]
  %v690 = vmul.f32 %v580, %v689
  %v691 = vadd.f32 %v687, %v690
  %s692 = scalar_lea.vmem %s1, 1568
  %v693 = vld [vmem:[%s692] sm:$0xff]
  %v694 = vmul.f32 %v611, %v693
  %v695 = vadd.f32 %v691, %v694
  %s696 = scalar_lea.vmem %s1, 1576
  %v697 = vld [vmem:[%s696] sm:$0xff]
  %v698 = vmul.f32 %v642, %v697
  %v699 = vadd.f32 %v695, %v698
  %s700 = scalar_lea.vmem %s1, 1584
  %v701 = vld [vmem:[%s700] sm:$0xff]
  %v702 = vmul.f32 %v673, %v701
  %v703 = vadd.f32 %v699, %v702
  %v704 = vmax.f32 %v703, 0.0
  %s705 = scalar_lea.vmem %s1, 1656
  %v706 = vld [vmem:[%s705] sm:$0xff]
  %s707 = scalar_lea.vmem %s1, 1600
  %v708 = vld [vmem:[%s707] sm:$0xff]
  %v709 = vmul.f32 %v487, %v708
  %v710 = vadd.f32 %v706, %v709
  %s711 = scalar_lea.vmem %s1, 1608
  %v712 = vld [vmem:[%s711] sm:$0xff]
  %v713 = vmul.f32 %v518, %v712
  %v714 = vadd.f32 %v710, %v713
  %s715 = scalar_lea.vmem %s1, 1616
  %v716 = vld [vmem:[%s715] sm:$0xff]
  %v717 = vmul.f32 %v549, %v716
  %v718 = vadd.f32 %v714, %v717
  %s719 = scalar_lea.vmem %s1, 1624
  %v720 = vld [vmem:[%s719] sm:$0xff]
  %v721 = vmul.f32 %v580, %v720
  %v722 = vadd.f32 %v718, %v721
  %s723 = scalar_lea.vmem %s1, 1632
  %v724 = vld [vmem:[%s723] sm:$0xff]
  %v725 = vmul.f32 %v611, %v724
  %v726 = vadd.f32 %v722, %v725
  %s727 = scalar_lea.vmem %s1, 1640
  %v728 = vld [vmem:[%s727] sm:$0xff]
  %v729 = vmul.f32 %v642, %v728
  %v730 = vadd.f32 %v726, %v729
  %s731 = scalar_lea.vmem %s1, 1648
  %v732 = vld [vmem:[%s731] sm:$0xff]
  %v733 = vmul.f32 %v673, %v732
  %v734 = vadd.f32 %v730, %v733
  %v735 = vmax.f32 %v734, 0.0
  %v736 = vsub.f32 %v735, %v704
  %v737 = vand.u32 2147483647, %v736
  %v738 = vsub.f32 0.0, %v737
  %v739 = vmul.f32 %v738, 1.442695
  %v740 = vpow.pop %v739
  %v741 = vadd.f32 %v740, 1.0
  %v742 = vrcp.pop %v741
  %v743 = vmul.f32 %v741, %v742
  %v744 = vsub.f32 1.0, %v743
  %v745 = vmul.f32 %v742, %v744
  %v746 = vadd.f32 %v742, %v745
  %vm747 = vweird.f32 %v741
  %vm748 = vweird.f32 %v742
  %vm749 = vmor %vm747, %vm748
  %v750 = vsel %vm749, %v742, %v746
  %v751 = vand.u32 2147483647, %v741
  %vm752 = vcmp.eq.f32.partialorder %v751, 8.507059e+37
  %v753 = vand.u32 %v741, 2147483648
  %v754 = vor.u32 1.1754944e-38, %v753
  %v755 = vsel %vm752, %v754, %v750
  %vm756 = vcmp.ge.f32.partialorder %v736, 0.0
  %v757 = vmul.f32 %v740, %v755
  %v758 = vsel %vm756, %v755, %v757
  %v759 = vsub.f32 1.0, %v758
  %760 = vst [vmem:[%s2] sm:$0xff] %v759
  %s761 = scalar_lea.vmem %s2, 8
  %762 = vst [vmem:[%s761] sm:$0xff] %v758
  // Predicated region
  $region10: #{_rnn_forward.1} parent=0 // pred_check
    _
  $region11: #{_rnn_forward.1} parent=0 // pred_check_branch
    %764 = sbr.rel (0) target = $region13
  $region12: #{_rnn_forward.1} parent=0 // pred_region
    _
  $region13: #{_rnn_forward.1} parent=0 // pred_fallthru
    _
  // Predicated region
  $region14: #{_rnn_forward.1} parent=0 // pred_check
    _
  $region15: #{_rnn_forward.1} parent=0 // pred_check_branch
    %766 = sbr.rel (0) target = $region17
  $region16: #{_rnn_forward.1} parent=0 // pred_region
    _
  $region17: #{_rnn_forward.1} parent=0 // pred_fallthru
    _

</llo_original>
